<compile_context>
chip_gen: v7x
topology: tpu7x:2x2x1
jax: 0.10.0
libtpu: 0.0.40
codegen_flags: <defaults>
</compile_context>

<pallas_src>
import functools

import jax
import jax.numpy as jnp
from jax.experimental import pallas as pl
from jax.experimental.pallas import tpu as pltpu


# ----------------------------------------------------------------------------
# Pallas kernel: fused parameter expansion + pair energy + mask + row reduce
# ----------------------------------------------------------------------------
def _e2b_kernel(rma_ref, rmb_ref, rmc_ref, rmd_ref, zc_ref, brow_ref, bcol_ref,
                r_ref, fcut_ref, out_ref, *, num_types):
    i = pl.program_id(0)   # row tile   (parallel)
    k = pl.program_id(1)   # column tile (reduction axis, last)

    @pl.when(k == 0)
    def _():
        out_ref[...] = jnp.zeros_like(out_ref)

    r = r_ref[...]          # (tm, tn) f32
    fcut = fcut_ref[...]    # (tm, tn) f32
    zc = zc_ref[...]        # (1, tn) int32 — column atom types
    brow = brow_ref[...]    # (tm, 1) int32 — row graph ids
    bcol = bcol_ref[...]    # (1, tn) int32 — column graph ids
    tm, tn = r.shape

    # keep = same graph AND off the global diagonal
    row_ids = i * tm + jax.lax.broadcasted_iota(jnp.int32, (tm, 1), 0)
    col_ids = k * tn + jax.lax.broadcasted_iota(jnp.int32, (1, tn), 1)
    keep = (brow == bcol) & (row_ids != col_ids)              # (tm, tn) bool

    # Per-pair parameters ref[z_i, z_j]: the row-gathered tables (tm, T) are
    # expanded along columns with a select chain over z_j.  The (1, tn)
    # comparisons are shared by all four tables (cheap, row-vector sized).
    sels = [zc == t for t in range(num_types - 1)]

    def expand(rm):                                   # (tm, T) -> (tm, tn)
        out = rm[:, num_types - 1:num_types]
        for t in range(num_types - 2, -1, -1):
            out = jnp.where(sels[t], rm[:, t:t + 1], out)
        return out

    a_exp = expand(rma_ref[...])      # A * exp(B * mu)  (pre-folded table)
    neg_b = expand(rmb_ref[...])      # -B
    c = expand(rmc_ref[...])
    d = expand(rmd_ref[...])

    # Pair energy.  R is clamped at masked entries so the R=0 diagonal (and
    # any cross-graph zero) never produces inf/NaN.
    r_safe = jnp.where(keep, r, 1.0)
    r2 = r_safe * r_safe
    inv2 = pl.reciprocal(r2, approx=True)
    inv2 = inv2 * (2.0 - r2 * inv2)   # one Newton step -> ~f32-accurate 1/R^2
    inv6 = inv2 * inv2 * inv2
    inv8 = inv6 * inv2
    e = a_exp * jnp.exp(neg_b * r_safe) - c * inv6 - d * inv8
    e = jnp.where(keep, e * fcut, 0.0)

    # atomic two-body energy: accumulate 0.5 * row sums across column tiles
    out_ref[...] += 0.5 * jnp.sum(e, axis=-1, keepdims=True)


def _pick_tile(n, cap, align):
    """Largest multiple of `align` that divides n and is <= cap (else n)."""
    best = None
    t = align
    cap = min(cap, n)
    while t <= cap:
        if n % t == 0:
            best = t
        t += align
    return best if best is not None else n


def atomic_e2b_pallas(ref_A, ref_B, ref_C, ref_D, ref_mu, z, batch, R, F_cut,
                      *, row_tile=None, col_tile=None):
    N = R.shape[0]
    T = ref_A.shape[0]

    # Fold A*exp(B*mu) into one table and carry -B so the kernel evaluates
    # Aexp * exp(-B * R)  ==  A * exp(B * (mu - R)).
    aexp_tab = (ref_A * jnp.exp(ref_B * ref_mu)).astype(jnp.float32)
    negb_tab = (-ref_B).astype(jnp.float32)

    z = z.astype(jnp.int32)
    rmA = aexp_tab[z]                                  # (N, T) row tables
    rmB = negb_tab[z]
    rmC = ref_C.astype(jnp.float32)[z]
    rmD = ref_D.astype(jnp.float32)[z]

    zc = z.reshape(1, N)
    brow = batch.astype(jnp.int32).reshape(N, 1)
    bcol = batch.astype(jnp.int32).reshape(1, N)
    R = R.astype(jnp.float32)
    F_cut = F_cut.astype(jnp.float32)

    # Row tiles (sublane axis, multiple of 8, >=2 grid steps when possible
    # for v7x's two cores); column tiles (lane axis, multiple of 128, <=2048
    # to keep the double-buffered VMEM footprint small on every generation).
    tm = row_tile or _pick_tile(N, min(256, max(8, N // 2)), 8)
    tn = col_tile or _pick_tile(N, 2048, 128)
    assert N % tm == 0 and N % tn == 0

    grid = (N // tm, N // tn)

    def row_spec(bs):
        return pl.BlockSpec(bs, lambda i, k: (i, 0))

    def col_spec(bs):
        return pl.BlockSpec(bs, lambda i, k: (0, k))

    tile_spec = pl.BlockSpec((tm, tn), lambda i, k: (i, k))

    kernel = functools.partial(_e2b_kernel, num_types=T)

    return pl.pallas_call(
        kernel,
        out_shape=jax.ShapeDtypeStruct((N, 1), jnp.float32),
        grid=grid,
        in_specs=[
            row_spec((tm, T)),   # Aexp rows
            row_spec((tm, T)),   # -B rows
            row_spec((tm, T)),   # C rows
            row_spec((tm, T)),   # D rows
            col_spec((1, tn)),   # z of column atoms
            row_spec((tm, 1)),   # graph id of row atoms
            col_spec((1, tn)),   # graph id of column atoms
            tile_spec,           # R
            tile_spec,           # F_cut
        ],
        out_specs=pl.BlockSpec((tm, 1), lambda i, k: (i, 0)),
        compiler_params=pltpu.CompilerParams(
            dimension_semantics=("parallel", "arbitrary"),
            vmem_limit_bytes=48 * 1024 * 1024,
        ),
    )(rmA, rmB, rmC, rmD, zc, brow, bcol, R, F_cut)


# ----------------------------------------------------------------------------
# Forward glue (per-graph scatter-sum and final additions stay in plain JAX)
# ----------------------------------------------------------------------------
def total_energy_sum_forward(refs, data):
    z = jnp.argmax(data["node_attrs"], axis=-1).astype(jnp.int32)
    batch = data["batch"]

    atomic_E_2b = atomic_e2b_pallas(
        refs["ref_A"], refs["ref_B"], refs["ref_C"], refs["ref_D"],
        refs["ref_mu"], z, batch, data["R"], data["F_cut"])

    num_graphs = int(data["electric_energy"].shape[0])
    E_2b = jax.ops.segment_sum(atomic_E_2b, batch, num_segments=num_graphs)

    E_tot = data["electric_energy"] + E_2b + data["short_energy"]
    atomic_E = (
        data["atomic_electric_energy"] + atomic_E_2b + data["atomic_short_energy"]
    )

    out = dict(data)
    out["node_energy"] = atomic_E
    out["energy"] = E_tot
    for key in ("atomic_electric_energy", "electric_energy", "R", "F_cut"):
        out.pop(key)
    return out


# ----------------------------------------------------------------------------
# Test-only helpers: dense block-diagonal parameters + pure-JAX reference
# ----------------------------------------------------------------------------
def make_pair_params(ref_mat, z, batch):
    same_graph = (batch[:, None] == batch[None, :]).astype(ref_mat.dtype)
    return ref_mat[z[:, None], z[None, :]] * same_graph


def _atomic_e2b_ref(A, B, C, D, mu, R, F_cut):
    e = (A * jnp.exp(B * (mu - R)) - C / R**6 - D / R**8) * F_cut
    n = e.shape[0]
    e = jnp.where(jnp.eye(n, dtype=bool), 0.0, e)
    return jnp.sum(e, axis=-1, keepdims=True) * 0.5


if __name__ == "__main__":
    key = jax.random.PRNGKey(0)
    num_types = 3
    atoms_per_graph = 128
    num_graphs = 2
    N = atoms_per_graph * num_graphs  # 256 total nodes

    keys = jax.random.split(key, 12)

    def sym(k, lo, hi):
        m = jax.random.uniform(k, (num_types, num_types), jnp.float32, lo, hi)
        return 0.5 * (m + m.T)

    refs = {
        "ref_A": sym(keys[0], 0.5, 1.5),
        "ref_B": sym(keys[1], 0.5, 1.5),
        "ref_C": sym(keys[2], 0.1, 0.5),
        "ref_D": sym(keys[3], 0.1, 0.5),
        "ref_mu": sym(keys[4], 0.5, 1.5),
    }

    batch = jnp.repeat(jnp.arange(num_graphs, dtype=jnp.int32), atoms_per_graph)
    z = jax.random.randint(keys[5], (N,), 0, num_types)
    node_attrs = jax.nn.one_hot(z, num_types, dtype=jnp.float32)

    pos = jax.random.uniform(keys[6], (N, 3), jnp.float32, 0.0, 8.0)
    diff = pos[:, None, :] - pos[None, :, :]
    R = jnp.sqrt(jnp.sum(diff * diff, axis=-1) + 1e-12)
    R = jnp.maximum(R, 0.5)                            # keep pairs well separated
    R = R * (1.0 - jnp.eye(N, dtype=jnp.float32))      # exact-zero diagonal as in torch

    rcut = 6.0
    F_cut = 0.5 * (jnp.cos(jnp.pi * jnp.clip(R / rcut, 0.0, 1.0)) + 1.0)
    F_cut = F_cut * (R < rcut).astype(jnp.float32)

    data = {
        "batch": batch,
        "node_attrs": node_attrs,
        "R": R,
        "F_cut": F_cut,
        "electric_energy": jax.random.normal(keys[7], (num_graphs, 1), jnp.float32),
        "atomic_electric_energy": jax.random.normal(keys[8], (N, 1), jnp.float32),
        "short_energy": jax.random.normal(keys[9], (num_graphs, 1), jnp.float32),
        "atomic_short_energy": jax.random.normal(keys[10], (N, 1), jnp.float32),
    }

    out = total_energy_sum_forward(refs, data)
    jax.block_until_ready(out["energy"])
    jax.block_until_ready(out["node_energy"])

    # sanity check: fused kernel vs. dense pure-JAX reference of the hot path
    A = make_pair_params(refs["ref_A"], z, batch)
    B = make_pair_params(refs["ref_B"], z, batch)
    C = make_pair_params(refs["ref_C"], z, batch)
    D = make_pair_params(refs["ref_D"], z, batch)
    mu = make_pair_params(refs["ref_mu"], z, batch)
    got = atomic_e2b_pallas(refs["ref_A"], refs["ref_B"], refs["ref_C"],
                            refs["ref_D"], refs["ref_mu"], z, batch, R, F_cut)
    want = _atomic_e2b_ref(A, B, C, D, mu, R, F_cut)
    # tolerance covers exp(B*mu)*exp(-B*R) folding + Newton-refined reciprocal
    assert jnp.allclose(got, want, rtol=1e-4, atol=1e-4), "kernel mismatch"

    print("KERNEL_OK")
</pallas_src>

<mosaic_0001>
module attributes {stable_mosaic.version = 11 : i64} {
  func.func @_e2b_kernel(%arg0: i32, %arg1: i32, %arg2: memref<128x3xf32, #tpu.memory_space<vmem>>, %arg3: memref<128x3xf32, #tpu.memory_space<vmem>>, %arg4: memref<128x3xf32, #tpu.memory_space<vmem>>, %arg5: memref<128x3xf32, #tpu.memory_space<vmem>>, %arg6: memref<1x256xi32, #tpu.memory_space<vmem>>, %arg7: memref<128x1xi32, #tpu.memory_space<vmem>>, %arg8: memref<1x256xi32, #tpu.memory_space<vmem>>, %arg9: memref<128x256xf32, #tpu.memory_space<vmem>>, %arg10: memref<128x256xf32, #tpu.memory_space<vmem>>, %arg11: memref<128x1xf32, #tpu.memory_space<vmem>>) attributes {dimension_semantics = [#tpu.dimension_semantics<parallel>, #tpu.dimension_semantics<arbitrary>], iteration_bounds = array<i64: 2, 1>, scalar_prefetch = 0 : i64, scratch_operands = 0 : i64, tpu.core_type = #tpu.core_type<tc>, window_params = [{transform_indices = @transform_0, window_bounds = array<i64: 128, 3>}, {transform_indices = @transform_1, window_bounds = array<i64: 128, 3>}, {transform_indices = @transform_2, window_bounds = array<i64: 128, 3>}, {transform_indices = @transform_3, window_bounds = array<i64: 128, 3>}, {transform_indices = @transform_4, window_bounds = array<i64: 1, 256>}, {transform_indices = @transform_5, window_bounds = array<i64: 128, 1>}, {transform_indices = @transform_6, window_bounds = array<i64: 1, 256>}, {transform_indices = @transform_7, window_bounds = array<i64: 128, 256>}, {transform_indices = @transform_8, window_bounds = array<i64: 128, 256>}, {transform_indices = @transform_9, window_bounds = array<i64: 128, 1>}]} {
    %c0_i32 = arith.constant 0 : i32
    %0 = arith.cmpi eq, %arg1, %c0_i32 : i32
    %1 = arith.extui %0 : i1 to i32
    %c0_i32_0 = arith.constant 0 : i32
    %2 = arith.cmpi ne, %1, %c0_i32_0 : i32
    scf.if %2 {
      %cst_27 = arith.constant 0.000000e+00 : f32
      %119 = vector.broadcast %cst_27 : f32 to vector<128x1xf32>
      %c0_28 = arith.constant 0 : index
      %c0_29 = arith.constant 0 : index
      %120 = vector.load %arg11[%c0_28, %c0_29] : memref<128x1xf32, #tpu.memory_space<vmem>>, vector<128x1xf32>
      tpu.vector_store %arg11[%c0_28, %c0_29], %119 {strides = array<i32>} : memref<128x1xf32, #tpu.memory_space<vmem>>, vector<128x1xf32>,
    } else {
    }
    %c0 = arith.constant 0 : index
    %c0_1 = arith.constant 0 : index
    %3 = vector.load %arg9[%c0, %c0_1] : memref<128x256xf32, #tpu.memory_space<vmem>>, vector<128x256xf32>
    %c0_2 = arith.constant 0 : index
    %c0_3 = arith.constant 0 : index
    %4 = vector.load %arg10[%c0_2, %c0_3] : memref<128x256xf32, #tpu.memory_space<vmem>>, vector<128x256xf32>
    %c0_4 = arith.constant 0 : index
    %c0_5 = arith.constant 0 : index
    %5 = vector.load %arg6[%c0_4, %c0_5] : memref<1x256xi32, #tpu.memory_space<vmem>>, vector<1x256xi32>
    %c0_6 = arith.constant 0 : index
    %c0_7 = arith.constant 0 : index
    %6 = vector.load %arg7[%c0_6, %c0_7] : memref<128x1xi32, #tpu.memory_space<vmem>>, vector<128x1xi32>
    %c0_8 = arith.constant 0 : index
    %c0_9 = arith.constant 0 : index
    %7 = vector.load %arg8[%c0_8, %c0_9] : memref<1x256xi32, #tpu.memory_space<vmem>>, vector<1x256xi32>
    %c128_i32 = arith.constant 128 : i32
    %8 = arith.muli %arg0, %c128_i32 : i32
    %9 = tpu.iota {dimensions = array<i32: 0>} : vector<128x1xi32>
    %10 = vector.broadcast %8 : i32 to vector<128x1xi32>
    %11 = arith.addi %10, %9 : vector<128x1xi32>
    %c256_i32 = arith.constant 256 : i32
    %12 = arith.muli %arg1, %c256_i32 : i32
    %13 = tpu.iota {dimensions = array<i32: 1>} : vector<1x256xi32>
    %14 = vector.broadcast %12 : i32 to vector<1x256xi32>
    %15 = arith.addi %14, %13 : vector<1x256xi32>
    %16 = vector.broadcast %6 : vector<128x1xi32> to vector<128x256xi32>
    %17 = vector.broadcast %7 : vector<1x256xi32> to vector<128x256xi32>
    %18 = arith.cmpi eq, %16, %17 : vector<128x256xi32>
    %19 = vector.broadcast %11 : vector<128x1xi32> to vector<128x256xi32>
    %20 = vector.broadcast %15 : vector<1x256xi32> to vector<128x256xi32>
    %21 = arith.cmpi ne, %19, %20 : vector<128x256xi32>
    %22 = arith.andi %18, %21 : vector<128x256xi1>
    %c0_i32_10 = arith.constant 0 : i32
    %23 = vector.broadcast %c0_i32_10 : i32 to vector<1x256xi32>
    %24 = arith.cmpi eq, %5, %23 : vector<1x256xi32>
    %c1_i32 = arith.constant 1 : i32
    %25 = vector.broadcast %c1_i32 : i32 to vector<1x256xi32>
    %26 = arith.cmpi eq, %5, %25 : vector<1x256xi32>
    %c0_11 = arith.constant 0 : index
    %c0_12 = arith.constant 0 : index
    %27 = vector.load %arg2[%c0_11, %c0_12] : memref<128x3xf32, #tpu.memory_space<vmem>>, vector<128x3xf32>
    %28 = vector.extract_strided_slice %27 {offsets = [0, 2], sizes = [128, 1], strides = [1, 1]} : vector<128x3xf32> to vector<128x1xf32>
    %29 = vector.extract_strided_slice %27 {offsets = [0, 1], sizes = [128, 1], strides = [1, 1]} : vector<128x3xf32> to vector<128x1xf32>
    %30 = vector.shape_cast %26 : vector<1x256xi1> to vector<1x256xi1>
    %31 = vector.broadcast %30 : vector<1x256xi1> to vector<128x256xi1>
    %32 = vector.shape_cast %29 : vector<128x1xf32> to vector<128x1xf32>
    %33 = vector.broadcast %32 : vector<128x1xf32> to vector<128x256xf32>
    %34 = vector.shape_cast %28 : vector<128x1xf32> to vector<128x1xf32>
    %35 = vector.broadcast %34 : vector<128x1xf32> to vector<128x256xf32>
    %36 = arith.select %31, %33, %35 : vector<128x256xi1>, vector<128x256xf32>
    %37 = vector.extract_strided_slice %27 {offsets = [0, 0], sizes = [128, 1], strides = [1, 1]} : vector<128x3xf32> to vector<128x1xf32>
    %38 = vector.shape_cast %24 : vector<1x256xi1> to vector<1x256xi1>
    %39 = vector.broadcast %38 : vector<1x256xi1> to vector<128x256xi1>
    %40 = vector.shape_cast %37 : vector<128x1xf32> to vector<128x1xf32>
    %41 = vector.broadcast %40 : vector<128x1xf32> to vector<128x256xf32>
    %42 = arith.select %39, %41, %36 : vector<128x256xi1>, vector<128x256xf32>
    %c0_13 = arith.constant 0 : index
    %c0_14 = arith.constant 0 : index
    %43 = vector.load %arg3[%c0_13, %c0_14] : memref<128x3xf32, #tpu.memory_space<vmem>>, vector<128x3xf32>
    %44 = vector.extract_strided_slice %43 {offsets = [0, 2], sizes = [128, 1], strides = [1, 1]} : vector<128x3xf32> to vector<128x1xf32>
    %45 = vector.extract_strided_slice %43 {offsets = [0, 1], sizes = [128, 1], strides = [1, 1]} : vector<128x3xf32> to vector<128x1xf32>
    %46 = vector.shape_cast %26 : vector<1x256xi1> to vector<1x256xi1>
    %47 = vector.broadcast %46 : vector<1x256xi1> to vector<128x256xi1>
    %48 = vector.shape_cast %45 : vector<128x1xf32> to vector<128x1xf32>
    %49 = vector.broadcast %48 : vector<128x1xf32> to vector<128x256xf32>
    %50 = vector.shape_cast %44 : vector<128x1xf32> to vector<128x1xf32>
    %51 = vector.broadcast %50 : vector<128x1xf32> to vector<128x256xf32>
    %52 = arith.select %47, %49, %51 : vector<128x256xi1>, vector<128x256xf32>
    %53 = vector.extract_strided_slice %43 {offsets = [0, 0], sizes = [128, 1], strides = [1, 1]} : vector<128x3xf32> to vector<128x1xf32>
    %54 = vector.shape_cast %24 : vector<1x256xi1> to vector<1x256xi1>
    %55 = vector.broadcast %54 : vector<1x256xi1> to vector<128x256xi1>
    %56 = vector.shape_cast %53 : vector<128x1xf32> to vector<128x1xf32>
    %57 = vector.broadcast %56 : vector<128x1xf32> to vector<128x256xf32>
    %58 = arith.select %55, %57, %52 : vector<128x256xi1>, vector<128x256xf32>
    %c0_15 = arith.constant 0 : index
    %c0_16 = arith.constant 0 : index
    %59 = vector.load %arg4[%c0_15, %c0_16] : memref<128x3xf32, #tpu.memory_space<vmem>>, vector<128x3xf32>
    %60 = vector.extract_strided_slice %59 {offsets = [0, 2], sizes = [128, 1], strides = [1, 1]} : vector<128x3xf32> to vector<128x1xf32>
    %61 = vector.extract_strided_slice %59 {offsets = [0, 1], sizes = [128, 1], strides = [1, 1]} : vector<128x3xf32> to vector<128x1xf32>
    %62 = vector.shape_cast %26 : vector<1x256xi1> to vector<1x256xi1>
    %63 = vector.broadcast %62 : vector<1x256xi1> to vector<128x256xi1>
    %64 = vector.shape_cast %61 : vector<128x1xf32> to vector<128x1xf32>
    %65 = vector.broadcast %64 : vector<128x1xf32> to vector<128x256xf32>
    %66 = vector.shape_cast %60 : vector<128x1xf32> to vector<128x1xf32>
    %67 = vector.broadcast %66 : vector<128x1xf32> to vector<128x256xf32>
    %68 = arith.select %63, %65, %67 : vector<128x256xi1>, vector<128x256xf32>
    %69 = vector.extract_strided_slice %59 {offsets = [0, 0], sizes = [128, 1], strides = [1, 1]} : vector<128x3xf32> to vector<128x1xf32>
    %70 = vector.shape_cast %24 : vector<1x256xi1> to vector<1x256xi1>
    %71 = vector.broadcast %70 : vector<1x256xi1> to vector<128x256xi1>
    %72 = vector.shape_cast %69 : vector<128x1xf32> to vector<128x1xf32>
    %73 = vector.broadcast %72 : vector<128x1xf32> to vector<128x256xf32>
    %74 = arith.select %71, %73, %68 : vector<128x256xi1>, vector<128x256xf32>
    %c0_17 = arith.constant 0 : index
    %c0_18 = arith.constant 0 : index
    %75 = vector.load %arg5[%c0_17, %c0_18] : memref<128x3xf32, #tpu.memory_space<vmem>>, vector<128x3xf32>
    %76 = vector.extract_strided_slice %75 {offsets = [0, 2], sizes = [128, 1], strides = [1, 1]} : vector<128x3xf32> to vector<128x1xf32>
    %77 = vector.extract_strided_slice %75 {offsets = [0, 1], sizes = [128, 1], strides = [1, 1]} : vector<128x3xf32> to vector<128x1xf32>
    %78 = vector.shape_cast %26 : vector<1x256xi1> to vector<1x256xi1>
    %79 = vector.broadcast %78 : vector<1x256xi1> to vector<128x256xi1>
    %80 = vector.shape_cast %77 : vector<128x1xf32> to vector<128x1xf32>
    %81 = vector.broadcast %80 : vector<128x1xf32> to vector<128x256xf32>
    %82 = vector.shape_cast %76 : vector<128x1xf32> to vector<128x1xf32>
    %83 = vector.broadcast %82 : vector<128x1xf32> to vector<128x256xf32>
    %84 = arith.select %79, %81, %83 : vector<128x256xi1>, vector<128x256xf32>
    %85 = vector.extract_strided_slice %75 {offsets = [0, 0], sizes = [128, 1], strides = [1, 1]} : vector<128x3xf32> to vector<128x1xf32>
    %86 = vector.shape_cast %24 : vector<1x256xi1> to vector<1x256xi1>
    %87 = vector.broadcast %86 : vector<1x256xi1> to vector<128x256xi1>
    %88 = vector.shape_cast %85 : vector<128x1xf32> to vector<128x1xf32>
    %89 = vector.broadcast %88 : vector<128x1xf32> to vector<128x256xf32>
    %90 = arith.select %87, %89, %84 : vector<128x256xi1>, vector<128x256xf32>
    %cst = arith.constant 1.000000e+00 : f32
    %91 = vector.broadcast %cst : f32 to vector<128x256xf32>
    %92 = arith.select %22, %3, %91 : vector<128x256xi1>, vector<128x256xf32>
    %93 = arith.mulf %92, %92 : vector<128x256xf32>
    %94 = tpu.reciprocal %93 {approx = true} : vector<128x256xf32> -> vector<128x256xf32>
    %95 = arith.mulf %93, %94 : vector<128x256xf32>
    %cst_19 = arith.constant 2.000000e+00 : f32
    %96 = vector.broadcast %cst_19 : f32 to vector<128x256xf32>
    %97 = arith.subf %96, %95 : vector<128x256xf32>
    %98 = arith.mulf %94, %97 : vector<128x256xf32>
    %99 = arith.mulf %98, %98 : vector<128x256xf32>
    %100 = arith.mulf %99, %98 : vector<128x256xf32>
    %101 = arith.mulf %100, %98 : vector<128x256xf32>
    %102 = arith.mulf %58, %92 : vector<128x256xf32>
    %103 = math.exp %102 : vector<128x256xf32>
    %104 = arith.mulf %42, %103 : vector<128x256xf32>
    %105 = arith.mulf %74, %100 : vector<128x256xf32>
    %106 = arith.subf %104, %105 : vector<128x256xf32>
    %107 = arith.mulf %90, %101 : vector<128x256xf32>
    %108 = arith.subf %106, %107 : vector<128x256xf32>
    %109 = arith.mulf %108, %4 : vector<128x256xf32>
    %cst_20 = arith.constant 0.000000e+00 : f32
    %110 = vector.broadcast %cst_20 : f32 to vector<128x256xf32>
    %111 = arith.select %22, %109, %110 : vector<128x256xi1>, vector<128x256xf32>
    %c0_21 = arith.constant 0 : index
    %c0_22 = arith.constant 0 : index
    %112 = vector.load %arg11[%c0_21, %c0_22] : memref<128x1xf32, #tpu.memory_space<vmem>>, vector<128x1xf32>
    %cst_23 = arith.constant dense<0.000000e+00> : vector<128xf32>
    %113 = vector.multi_reduction <add>, %111, %cst_23 [1] : vector<128x256xf32> to vector<128xf32>
    %114 = vector.shape_cast %113 : vector<128xf32> to vector<128x1xf32>
    %cst_24 = arith.constant 5.000000e-01 : f32
    %115 = vector.broadcast %cst_24 : f32 to vector<128x1xf32>
    %116 = arith.mulf %115, %114 : vector<128x1xf32>
    %117 = arith.addf %112, %116 : vector<128x1xf32>
    %c0_25 = arith.constant 0 : index
    %c0_26 = arith.constant 0 : index
    %118 = vector.load %arg11[%c0_25, %c0_26] : memref<128x1xf32, #tpu.memory_space<vmem>>, vector<128x1xf32>
    tpu.vector_store %arg11[%c0_25, %c0_26], %117 {strides = array<i32>} : memref<128x1xf32, #tpu.memory_space<vmem>>, vector<128x1xf32>,
    return
  }
  func.func @transform_0(%arg0: i32, %arg1: i32) -> (i32, i32) {
    %c0_i32 = arith.constant 0 : i32
    %c0_i32_0 = arith.constant 0 : i32
    return %arg0, %c0_i32 : i32, i32
  }
  func.func @transform_1(%arg0: i32, %arg1: i32) -> (i32, i32) {
    %c0_i32 = arith.constant 0 : i32
    %c0_i32_0 = arith.constant 0 : i32
    return %arg0, %c0_i32 : i32, i32
  }
  func.func @transform_2(%arg0: i32, %arg1: i32) -> (i32, i32) {
    %c0_i32 = arith.constant 0 : i32
    %c0_i32_0 = arith.constant 0 : i32
    return %arg0, %c0_i32 : i32, i32
  }
  func.func @transform_3(%arg0: i32, %arg1: i32) -> (i32, i32) {
    %c0_i32 = arith.constant 0 : i32
    %c0_i32_0 = arith.constant 0 : i32
    return %arg0, %c0_i32 : i32, i32
  }
  func.func @transform_4(%arg0: i32, %arg1: i32) -> (i32, i32) {
    %c0_i32 = arith.constant 0 : i32
    %c0_i32_0 = arith.constant 0 : i32
    return %c0_i32, %arg1 : i32, i32
  }
  func.func @transform_5(%arg0: i32, %arg1: i32) -> (i32, i32) {
    %c0_i32 = arith.constant 0 : i32
    %c0_i32_0 = arith.constant 0 : i32
    return %arg0, %c0_i32 : i32, i32
  }
  func.func @transform_6(%arg0: i32, %arg1: i32) -> (i32, i32) {
    %c0_i32 = arith.constant 0 : i32
    %c0_i32_0 = arith.constant 0 : i32
    return %c0_i32, %arg1 : i32, i32
  }
  func.func @transform_7(%arg0: i32, %arg1: i32) -> (i32, i32) {
    %c0_i32 = arith.constant 0 : i32
    return %arg0, %arg1 : i32, i32
  }
  func.func @transform_8(%arg0: i32, %arg1: i32) -> (i32, i32) {
    %c0_i32 = arith.constant 0 : i32
    return %arg0, %arg1 : i32, i32
  }
  func.func @transform_9(%arg0: i32, %arg1: i32) -> (i32, i32) {
    %c0_i32 = arith.constant 0 : i32
    %c0_i32_0 = arith.constant 0 : i32
    return %arg0, %c0_i32 : i32, i32
  }
}

</mosaic_0001>

<llo_original>
// kernel: tpu_custom_call.1
$region0: #{tpu_custom_call.1}
  #allocation0 [shape = 'u32[]', space=smem, size = 0x4, offset = 0x4, fixed_abs, tag = 'smem constant byte address 0x4 - core index']
  #allocation1 [shape = 'u32[144,128]{1,0:T(1,128)}', space=vmem, size = 0x12000, scoped, tag = 'internal scratch']
  %s0 = inlined_call_operand.vmem [shape: f32[256,3], index: 0, kind: input, shape index: {}]
  %s1 = inlined_call_operand.vmem [shape: f32[256,3], index: 1, kind: input, shape index: {}]
  %s2 = inlined_call_operand.vmem [shape: f32[256,3], index: 2, kind: input, shape index: {}]
  %s3 = inlined_call_operand.vmem [shape: f32[256,3], index: 3, kind: input, shape index: {}]
  %s4 = inlined_call_operand.vmem [shape: s32[1,256], index: 4, kind: input, shape index: {}]
  %s5 = inlined_call_operand.vmem [shape: s32[256,1], index: 5, kind: input, shape index: {}]
  %s6 = inlined_call_operand.vmem [shape: s32[1,256], index: 6, kind: input, shape index: {}]
  %s7 = inlined_call_operand.vmem [shape: f32[256,256], index: 7, kind: input, shape index: {}]
  %s8 = inlined_call_operand.vmem [shape: f32[256,256], index: 8, kind: input, shape index: {}]
  %s9 = inlined_call_operand.vmem [shape: f32[256,1], index: 9, kind: output, shape index: {}]
  %s10 = sld [smem:[#allocation0]]
  $region73: #{tpu_custom_call.1} parent=0
    _
  %s12 = ssub.s32 1, %s10
  %s13 = scalar_select 0, %s12, %s10
  loop: start=0, step=1, limit=4
  $region2: #{tpu_custom_call.1} parent=0 // loop_pre_header
    _
  $region3: #{tpu_custom_call.1} parent=0 // loop_header
    %s15 = sphi 0, %s19
    %p16 = scmp.ge.s32.totalorder %s15, 4
    %s22 = sphi 0, %s34
    %s23 = sphi 0, %s30
    %s24 = sphi 0, %s22
    %s25 = sphi 0, %s23
    %s26 = sphi 0, %s24
    %s27 = sphi 0, %s25
    %s37 = sphi 0, %s39
    %s40 = sphi 0, %s37
    %s41 = sphi 0, %s40
    %s57 = sphi 0, %s41
    %s63 = sphi 0, %s65
    %s66 = sphi 0, %s63
    %s67 = sphi 0, %s66
    %s83 = sphi 0, %s67
    %s89 = sphi 0, %s91
    %s92 = sphi 0, %s89
    %s93 = sphi 0, %s92
    %s109 = sphi 0, %s93
    %s115 = sphi 0, %s117
    %s118 = sphi 0, %s115
    %s119 = sphi 0, %s118
    %s135 = sphi 0, %s119
    %s141 = sphi 0, %s143
    %s144 = sphi 0, %s141
    %s145 = sphi 0, %s144
    %s161 = sphi 0, %s145
    %s167 = sphi 0, %s169
    %s170 = sphi 0, %s167
    %s171 = sphi 0, %s170
    %s187 = sphi 0, %s171
    %s193 = sphi 0, %s195
    %s196 = sphi 0, %s193
    %s197 = sphi 0, %s196
    %s213 = sphi 0, %s197
    %s221 = sphi 0, %s223
    %s224 = sphi 0, %s221
    %s225 = sphi 0, %s224
    %s241 = sphi 0, %s225
    %s249 = sphi 0, %s251
    %s252 = sphi 0, %s249
    %s253 = sphi 0, %s252
    %s269 = sphi 0, %s253
    %s275 = sphi 0, %s277
    %s278 = sphi 0, %s275
    %s279 = sphi 0, %s278
    %s295 = sphi 0, %s279
  $region4: #{tpu_custom_call.1} parent=0 // loop_header_branch
    %18 = sbr.rel (%p16) target = $region8
  $region5: #{tpu_custom_call.1} parent=0 // loop_body
    %s20 = ssub.s32 %s15, 1
    %s21 = ssub.s32 %s15, 2
    %s28 = sadd.s32 1, %s23
    %p29 = scmp.ge.s32.totalorder %s28, 1
    %s30 = scalar_select %p29, 0, %s28
    %s31 = sadd.s32 1, %s22
    %s32 = scalar_select %p29, %s31, %s22
    %p33 = scmp.ge.s32.totalorder %s32, 2
    %s34 = scalar_select %p33, 0, %s32
    %s35 = ssub.s32 %s22, %s34
    %p36 = scmp.eq.s32.totalorder %s35, 0
    %s38 = sadd.s32 %s37, 1
    %s39 = scalar_select %p36, %s37, %s38
    %p42 = pneg %p36
    %p43 = scmp.eq.s32.totalorder %s15, 1
    %p44 = por %p42, %p43
    %p45 = scmp.ne.s32.totalorder %s37, %s40
    %p46 = scmp.eq.s32.totalorder %s15, 0
    %p47 = por %p45, %p46
    %p48 = scmp.ne.s32.totalorder %s37, %s40
    %p49 = scmp.eq.s32.totalorder %s20, 1
    %p50 = por %p48, %p49
    %p51 = scmp.ne.s32.totalorder %s40, %s41
    %p52 = scmp.eq.s32.totalorder %s20, 0
    %p53 = por %p51, %p52
    %p54 = scmp.ne.s32.totalorder %s40, %s41
    %p55 = scmp.eq.s32.totalorder %s21, 1
    %p56 = por %p54, %p55
    %p58 = scmp.ne.s32.totalorder %s41, %s57
    %p59 = scmp.eq.s32.totalorder %s21, 0
    %p60 = por %p58, %p59
    %s61 = ssub.s32 %s22, %s34
    %p62 = scmp.eq.s32.totalorder %s61, 0
    %s64 = sadd.s32 %s63, 1
    %s65 = scalar_select %p62, %s63, %s64
    %p68 = pneg %p62
    %p69 = scmp.eq.s32.totalorder %s15, 1
    %p70 = por %p68, %p69
    %p71 = scmp.ne.s32.totalorder %s63, %s66
    %p72 = scmp.eq.s32.totalorder %s15, 0
    %p73 = por %p71, %p72
    %p74 = scmp.ne.s32.totalorder %s63, %s66
    %p75 = scmp.eq.s32.totalorder %s20, 1
    %p76 = por %p74, %p75
    %p77 = scmp.ne.s32.totalorder %s66, %s67
    %p78 = scmp.eq.s32.totalorder %s20, 0
    %p79 = por %p77, %p78
    %p80 = scmp.ne.s32.totalorder %s66, %s67
    %p81 = scmp.eq.s32.totalorder %s21, 1
    %p82 = por %p80, %p81
    %p84 = scmp.ne.s32.totalorder %s67, %s83
    %p85 = scmp.eq.s32.totalorder %s21, 0
    %p86 = por %p84, %p85
    %s87 = ssub.s32 %s22, %s34
    %p88 = scmp.eq.s32.totalorder %s87, 0
    %s90 = sadd.s32 %s89, 1
    %s91 = scalar_select %p88, %s89, %s90
    %p94 = pneg %p88
    %p95 = scmp.eq.s32.totalorder %s15, 1
    %p96 = por %p94, %p95
    %p97 = scmp.ne.s32.totalorder %s89, %s92
    %p98 = scmp.eq.s32.totalorder %s15, 0
    %p99 = por %p97, %p98
    %p100 = scmp.ne.s32.totalorder %s89, %s92
    %p101 = scmp.eq.s32.totalorder %s20, 1
    %p102 = por %p100, %p101
    %p103 = scmp.ne.s32.totalorder %s92, %s93
    %p104 = scmp.eq.s32.totalorder %s20, 0
    %p105 = por %p103, %p104
    %p106 = scmp.ne.s32.totalorder %s92, %s93
    %p107 = scmp.eq.s32.totalorder %s21, 1
    %p108 = por %p106, %p107
    %p110 = scmp.ne.s32.totalorder %s93, %s109
    %p111 = scmp.eq.s32.totalorder %s21, 0
    %p112 = por %p110, %p111
    %s113 = ssub.s32 %s22, %s34
    %p114 = scmp.eq.s32.totalorder %s113, 0
    %s116 = sadd.s32 %s115, 1
    %s117 = scalar_select %p114, %s115, %s116
    %p120 = pneg %p114
    %p121 = scmp.eq.s32.totalorder %s15, 1
    %p122 = por %p120, %p121
    %p123 = scmp.ne.s32.totalorder %s115, %s118
    %p124 = scmp.eq.s32.totalorder %s15, 0
    %p125 = por %p123, %p124
    %p126 = scmp.ne.s32.totalorder %s115, %s118
    %p127 = scmp.eq.s32.totalorder %s20, 1
    %p128 = por %p126, %p127
    %p129 = scmp.ne.s32.totalorder %s118, %s119
    %p130 = scmp.eq.s32.totalorder %s20, 0
    %p131 = por %p129, %p130
    %p132 = scmp.ne.s32.totalorder %s118, %s119
    %p133 = scmp.eq.s32.totalorder %s21, 1
    %p134 = por %p132, %p133
    %p136 = scmp.ne.s32.totalorder %s119, %s135
    %p137 = scmp.eq.s32.totalorder %s21, 0
    %p138 = por %p136, %p137
    %s139 = ssub.s32 %s23, %s30
    %p140 = scmp.eq.s32.totalorder %s139, 0
    %s142 = sadd.s32 %s141, 1
    %s143 = scalar_select %p140, %s141, %s142
    %p146 = pneg %p140
    %p147 = scmp.eq.s32.totalorder %s15, 1
    %p148 = por %p146, %p147
    %p149 = scmp.ne.s32.totalorder %s141, %s144
    %p150 = scmp.eq.s32.totalorder %s15, 0
    %p151 = por %p149, %p150
    %p152 = scmp.ne.s32.totalorder %s141, %s144
    %p153 = scmp.eq.s32.totalorder %s20, 1
    %p154 = por %p152, %p153
    %p155 = scmp.ne.s32.totalorder %s144, %s145
    %p156 = scmp.eq.s32.totalorder %s20, 0
    %p157 = por %p155, %p156
    %p158 = scmp.ne.s32.totalorder %s144, %s145
    %p159 = scmp.eq.s32.totalorder %s21, 1
    %p160 = por %p158, %p159
    %p162 = scmp.ne.s32.totalorder %s145, %s161
    %p163 = scmp.eq.s32.totalorder %s21, 0
    %p164 = por %p162, %p163
    %s165 = ssub.s32 %s22, %s34
    %p166 = scmp.eq.s32.totalorder %s165, 0
    %s168 = sadd.s32 %s167, 1
    %s169 = scalar_select %p166, %s167, %s168
    %p172 = pneg %p166
    %p173 = scmp.eq.s32.totalorder %s15, 1
    %p174 = por %p172, %p173
    %p175 = scmp.ne.s32.totalorder %s167, %s170
    %p176 = scmp.eq.s32.totalorder %s15, 0
    %p177 = por %p175, %p176
    %p178 = scmp.ne.s32.totalorder %s167, %s170
    %p179 = scmp.eq.s32.totalorder %s20, 1
    %p180 = por %p178, %p179
    %p181 = scmp.ne.s32.totalorder %s170, %s171
    %p182 = scmp.eq.s32.totalorder %s20, 0
    %p183 = por %p181, %p182
    %p184 = scmp.ne.s32.totalorder %s170, %s171
    %p185 = scmp.eq.s32.totalorder %s21, 1
    %p186 = por %p184, %p185
    %p188 = scmp.ne.s32.totalorder %s171, %s187
    %p189 = scmp.eq.s32.totalorder %s21, 0
    %p190 = por %p188, %p189
    %s191 = ssub.s32 %s23, %s30
    %p192 = scmp.eq.s32.totalorder %s191, 0
    %s194 = sadd.s32 %s193, 1
    %s195 = scalar_select %p192, %s193, %s194
    %p198 = pneg %p192
    %p199 = scmp.eq.s32.totalorder %s15, 1
    %p200 = por %p198, %p199
    %p201 = scmp.ne.s32.totalorder %s193, %s196
    %p202 = scmp.eq.s32.totalorder %s15, 0
    %p203 = por %p201, %p202
    %p204 = scmp.ne.s32.totalorder %s193, %s196
    %p205 = scmp.eq.s32.totalorder %s20, 1
    %p206 = por %p204, %p205
    %p207 = scmp.ne.s32.totalorder %s196, %s197
    %p208 = scmp.eq.s32.totalorder %s20, 0
    %p209 = por %p207, %p208
    %p210 = scmp.ne.s32.totalorder %s196, %s197
    %p211 = scmp.eq.s32.totalorder %s21, 1
    %p212 = por %p210, %p211
    %p214 = scmp.ne.s32.totalorder %s197, %s213
    %p215 = scmp.eq.s32.totalorder %s21, 0
    %p216 = por %p214, %p215
    %s217 = ssub.s32 %s22, %s34
    %s218 = ssub.s32 %s23, %s30
    %s219 = sor.u32 %s217, %s218
    %p220 = scmp.eq.s32.totalorder %s219, 0
    %s222 = sadd.s32 %s221, 1
    %s223 = scalar_select %p220, %s221, %s222
    %p226 = pneg %p220
    %p227 = scmp.eq.s32.totalorder %s15, 1
    %p228 = por %p226, %p227
    %p229 = scmp.ne.s32.totalorder %s221, %s224
    %p230 = scmp.eq.s32.totalorder %s15, 0
    %p231 = por %p229, %p230
    %p232 = scmp.ne.s32.totalorder %s221, %s224
    %p233 = scmp.eq.s32.totalorder %s20, 1
    %p234 = por %p232, %p233
    %p235 = scmp.ne.s32.totalorder %s224, %s225
    %p236 = scmp.eq.s32.totalorder %s20, 0
    %p237 = por %p235, %p236
    %p238 = scmp.ne.s32.totalorder %s224, %s225
    %p239 = scmp.eq.s32.totalorder %s21, 1
    %p240 = por %p238, %p239
    %p242 = scmp.ne.s32.totalorder %s225, %s241
    %p243 = scmp.eq.s32.totalorder %s21, 0
    %p244 = por %p242, %p243
    %s245 = ssub.s32 %s22, %s34
    %s246 = ssub.s32 %s23, %s30
    %s247 = sor.u32 %s245, %s246
    %p248 = scmp.eq.s32.totalorder %s247, 0
    %s250 = sadd.s32 %s249, 1
    %s251 = scalar_select %p248, %s249, %s250
    %p254 = pneg %p248
    %p255 = scmp.eq.s32.totalorder %s15, 1
    %p256 = por %p254, %p255
    %p257 = scmp.ne.s32.totalorder %s249, %s252
    %p258 = scmp.eq.s32.totalorder %s15, 0
    %p259 = por %p257, %p258
    %p260 = scmp.ne.s32.totalorder %s249, %s252
    %p261 = scmp.eq.s32.totalorder %s20, 1
    %p262 = por %p260, %p261
    %p263 = scmp.ne.s32.totalorder %s252, %s253
    %p264 = scmp.eq.s32.totalorder %s20, 0
    %p265 = por %p263, %p264
    %p266 = scmp.ne.s32.totalorder %s252, %s253
    %p267 = scmp.eq.s32.totalorder %s21, 1
    %p268 = por %p266, %p267
    %p270 = scmp.ne.s32.totalorder %s253, %s269
    %p271 = scmp.eq.s32.totalorder %s21, 0
    %p272 = por %p270, %p271
    %s273 = ssub.s32 %s22, %s34
    %p274 = scmp.eq.s32.totalorder %s273, 0
    %s276 = sadd.s32 %s275, 1
    %s277 = scalar_select %p274, %s275, %s276
    %p280 = pneg %p274
    %p281 = scmp.eq.s32.totalorder %s15, 1
    %p282 = por %p280, %p281
    %p283 = scmp.ne.s32.totalorder %s275, %s278
    %p284 = scmp.eq.s32.totalorder %s15, 0
    %p285 = por %p283, %p284
    %p286 = scmp.ne.s32.totalorder %s275, %s278
    %p287 = scmp.eq.s32.totalorder %s20, 1
    %p288 = por %p286, %p287
    %p289 = scmp.ne.s32.totalorder %s278, %s279
    %p290 = scmp.eq.s32.totalorder %s20, 0
    %p291 = por %p289, %p290
    %p292 = scmp.ne.s32.totalorder %s278, %s279
    %p293 = scmp.eq.s32.totalorder %s21, 1
    %p294 = por %p292, %p293
    %p296 = scmp.ne.s32.totalorder %s279, %s295
    %p297 = scmp.eq.s32.totalorder %s21, 0
    %p298 = por %p296, %p297
    %p299 = scmp.le.s32.totalorder 1, %s15
    %p300 = scmp.lt.s32.totalorder %s15, 3
    %p301 = pnand %p299, %p300
    %p302 = pneg %p301
    // Predicated region
    $region9: #{tpu_custom_call.1} parent=5 // pred_check
      _
    $region10: #{tpu_custom_call.1} parent=5 // pred_check_branch
      %304 = sbr.rel (%p301) target = $region12
    $region11: #{tpu_custom_call.1} parent=5 // pred_region
      %s305 = ssub.s32 %s15, 1
      // Predicated region
      $region13: #{tpu_custom_call.1} parent=11 // pred_check
        %p306 = pneg %p157
      $region14: #{tpu_custom_call.1} parent=11 // pred_check_branch
        %308 = sbr.rel (%p306) target = $region16
      $region15: #{tpu_custom_call.1} parent=11 // pred_region
        %s309 = smul.u32 2, %s25
        %p310 = scmp.lt.s32.totalorder %s309, 1
        %s311 = scalar_select %p310, %s309, 1
        %s312 = scalar_lea.vmem %s4, %s311
        %s313 = smul.u32 2, %s25
      $region16: #{tpu_custom_call.1} parent=11 // pred_fallthru
        _
      // Predicated region
      $region17: #{tpu_custom_call.1} parent=11 // pred_check
        %p314 = pneg %p209
      $region18: #{tpu_custom_call.1} parent=11 // pred_check_branch
        %316 = sbr.rel (%p314) target = $region20
      $region19: #{tpu_custom_call.1} parent=11 // pred_region
        %s317 = smul.u32 2, %s25
        %p318 = scmp.lt.s32.totalorder %s317, 1
        %s319 = scalar_select %p318, %s317, 1
        %s320 = scalar_lea.vmem %s6, %s319
        %s321 = smul.u32 2, %s25
      $region20: #{tpu_custom_call.1} parent=11 // pred_fallthru
        _
    $region12: #{tpu_custom_call.1} parent=5 // pred_fallthru
      _
    %p322 = scmp.lt.s32.totalorder %s15, 2
    // Predicated region
    $region21: #{tpu_custom_call.1} parent=5 // pred_check
      %p323 = pneg %p322
    $region22: #{tpu_custom_call.1} parent=5 // pred_check_branch
      %325 = sbr.rel (%p323) target = $region24
    $region23: #{tpu_custom_call.1} parent=5 // pred_region
      // Predicated region
      $region25: #{tpu_custom_call.1} parent=23 // pred_check
        %p326 = pneg %p47
      $region26: #{tpu_custom_call.1} parent=23 // pred_check_branch
        %328 = sbr.rel (%p326) target = $region28
      $region27: #{tpu_custom_call.1} parent=23 // pred_region
        %s329 = smul.u32 16, %s22
        %p330 = scmp.lt.s32.totalorder %s329, 31
        %s331 = scalar_select %p330, %s329, 31
        %s332 = smul.addr %s331, 8
        %s333 = scalar_lea.vmem %s0, %s332
        %s334 = smul.u32 16, %s22
      $region28: #{tpu_custom_call.1} parent=23 // pred_fallthru
        _
      // Predicated region
      $region29: #{tpu_custom_call.1} parent=23 // pred_check
        %p335 = pneg %p73
      $region30: #{tpu_custom_call.1} parent=23 // pred_check_branch
        %337 = sbr.rel (%p335) target = $region32
      $region31: #{tpu_custom_call.1} parent=23 // pred_region
        %s338 = smul.u32 16, %s22
        %p339 = scmp.lt.s32.totalorder %s338, 31
        %s340 = scalar_select %p339, %s338, 31
        %s341 = smul.addr %s340, 8
        %s342 = scalar_lea.vmem %s1, %s341
        %s343 = smul.u32 16, %s22
      $region32: #{tpu_custom_call.1} parent=23 // pred_fallthru
        _
      // Predicated region
      $region33: #{tpu_custom_call.1} parent=23 // pred_check
        %p344 = pneg %p99
      $region34: #{tpu_custom_call.1} parent=23 // pred_check_branch
        %346 = sbr.rel (%p344) target = $region36
      $region35: #{tpu_custom_call.1} parent=23 // pred_region
        %s347 = smul.u32 16, %s22
        %p348 = scmp.lt.s32.totalorder %s347, 31
        %s349 = scalar_select %p348, %s347, 31
        %s350 = smul.addr %s349, 8
        %s351 = scalar_lea.vmem %s2, %s350
        %s352 = smul.u32 16, %s22
      $region36: #{tpu_custom_call.1} parent=23 // pred_fallthru
        _
      // Predicated region
      $region37: #{tpu_custom_call.1} parent=23 // pred_check
        %p353 = pneg %p125
      $region38: #{tpu_custom_call.1} parent=23 // pred_check_branch
        %355 = sbr.rel (%p353) target = $region40
      $region39: #{tpu_custom_call.1} parent=23 // pred_region
        %s356 = smul.u32 16, %s22
        %p357 = scmp.lt.s32.totalorder %s356, 31
        %s358 = scalar_select %p357, %s356, 31
        %s359 = smul.addr %s358, 8
        %s360 = scalar_lea.vmem %s3, %s359
        %s361 = smul.u32 16, %s22
      $region40: #{tpu_custom_call.1} parent=23 // pred_fallthru
        _
      // Predicated region
      $region41: #{tpu_custom_call.1} parent=23 // pred_check
        %p362 = pneg %p177
      $region42: #{tpu_custom_call.1} parent=23 // pred_check_branch
        %364 = sbr.rel (%p362) target = $region44
      $region43: #{tpu_custom_call.1} parent=23 // pred_region
        %s365 = smul.u32 16, %s22
        %p366 = scmp.lt.s32.totalorder %s365, 31
        %s367 = scalar_select %p366, %s365, 31
        %s368 = smul.addr %s367, 8
        %s369 = scalar_lea.vmem %s5, %s368
        %s370 = smul.u32 16, %s22
      $region44: #{tpu_custom_call.1} parent=23 // pred_fallthru
        _
      // Predicated region
      $region45: #{tpu_custom_call.1} parent=23 // pred_check
        %p371 = pneg %p231
      $region46: #{tpu_custom_call.1} parent=23 // pred_check_branch
        %373 = sbr.rel (%p371) target = $region48
      $region47: #{tpu_custom_call.1} parent=23 // pred_region
        %s374 = smul.u32 16, %s22
        %s375 = smul.u32 2, %s23
        %p376 = scmp.lt.s32.totalorder %s374, 31
        %s377 = scalar_select %p376, %s374, 31
        %p378 = scmp.lt.s32.totalorder %s375, 1
        %s379 = scalar_select %p378, %s375, 1
        %s380 = smul.addr %s377, 2
        %s381 = sadd.s32 %s379, %s380
        %s382 = smul.addr %s381, 8
        %s383 = scalar_lea.vmem %s7, %s382
        %s384 = smul.u32 16, %s22
        %s385 = smul.u32 2, %s23
      $region48: #{tpu_custom_call.1} parent=23 // pred_fallthru
        _
      // Predicated region
      $region49: #{tpu_custom_call.1} parent=23 // pred_check
        %p386 = pneg %p259
      $region50: #{tpu_custom_call.1} parent=23 // pred_check_branch
        %388 = sbr.rel (%p386) target = $region52
      $region51: #{tpu_custom_call.1} parent=23 // pred_region
        %s389 = smul.u32 16, %s22
        %s390 = smul.u32 2, %s23
        %p391 = scmp.lt.s32.totalorder %s389, 31
        %s392 = scalar_select %p391, %s389, 31
        %p393 = scmp.lt.s32.totalorder %s390, 1
        %s394 = scalar_select %p393, %s390, 1
        %s395 = smul.addr %s392, 2
        %s396 = sadd.s32 %s394, %s395
        %s397 = smul.addr %s396, 8
        %s398 = scalar_lea.vmem %s8, %s397
        %s399 = smul.u32 16, %s22
        %s400 = smul.u32 2, %s23
      $region52: #{tpu_custom_call.1} parent=23 // pred_fallthru
        _
    $region24: #{tpu_custom_call.1} parent=5 // pred_fallthru
      _
    %p401 = scmp.le.s32.totalorder 1, %s15
    %p402 = scmp.lt.s32.totalorder %s15, 3
    %p403 = pnand %p401, %p402
    %p404 = pneg %p403
    // Predicated region
    $region53: #{tpu_custom_call.1} parent=5 // pred_check
      _
    $region54: #{tpu_custom_call.1} parent=5 // pred_check_branch
      %406 = sbr.rel (%p403) target = $region56
    $region55: #{tpu_custom_call.1} parent=5 // pred_region
      %s407 = ssub.s32 %s15, 1
      %s408 = smul.u32 16, %s24
      %p409 = scmp.lt.s32.totalorder %s408, 31
      %s410 = scalar_select %p409, %s408, 31
      %s411 = smul.addr %s410, 8
      %s412 = scalar_lea.vmem %s0, %s411
      %p413 = pneg %p53
      %p414 = pneg %p50
      %s415 = smul.u32 16, %s24
      %p416 = scmp.lt.s32.totalorder %s415, 31
      %s417 = scalar_select %p416, %s415, 31
      %s418 = smul.addr %s417, 8
      %s419 = scalar_lea.vmem %s1, %s418
      %p420 = pneg %p79
      %p421 = pneg %p76
      %s422 = smul.u32 16, %s24
      %p423 = scmp.lt.s32.totalorder %s422, 31
      %s424 = scalar_select %p423, %s422, 31
      %s425 = smul.addr %s424, 8
      %s426 = scalar_lea.vmem %s2, %s425
      %p427 = pneg %p105
      %p428 = pneg %p102
      %s429 = smul.u32 16, %s24
      %p430 = scmp.lt.s32.totalorder %s429, 31
      %s431 = scalar_select %p430, %s429, 31
      %s432 = smul.addr %s431, 8
      %s433 = scalar_lea.vmem %s3, %s432
      %p434 = pneg %p131
      %p435 = pneg %p128
      %s436 = smul.u32 2, %s25
      %p437 = scmp.lt.s32.totalorder %s436, 1
      %s438 = scalar_select %p437, %s436, 1
      %s439 = scalar_lea.vmem %s4, %s438
      %p440 = pneg %p157
      %p441 = pneg %p154
      %s442 = smul.u32 16, %s24
      %p443 = scmp.lt.s32.totalorder %s442, 31
      %s444 = scalar_select %p443, %s442, 31
      %s445 = smul.addr %s444, 8
      %s446 = scalar_lea.vmem %s5, %s445
      %p447 = pneg %p183
      %p448 = pneg %p180
      %s449 = smul.u32 2, %s25
      %p450 = scmp.lt.s32.totalorder %s449, 1
      %s451 = scalar_select %p450, %s449, 1
      %s452 = scalar_lea.vmem %s6, %s451
      %p453 = pneg %p209
      %p454 = pneg %p206
      %s455 = smul.u32 16, %s24
      %s456 = smul.u32 2, %s25
      %p457 = scmp.lt.s32.totalorder %s455, 31
      %s458 = scalar_select %p457, %s455, 31
      %p459 = scmp.lt.s32.totalorder %s456, 1
      %s460 = scalar_select %p459, %s456, 1
      %s461 = smul.addr %s458, 2
      %s462 = sadd.s32 %s460, %s461
      %s463 = smul.addr %s462, 8
      %s464 = scalar_lea.vmem %s7, %s463
      %p465 = pneg %p237
      %p466 = pneg %p234
      %s467 = smul.u32 16, %s24
      %s468 = smul.u32 2, %s25
      %p469 = scmp.lt.s32.totalorder %s467, 31
      %s470 = scalar_select %p469, %s467, 31
      %p471 = scmp.lt.s32.totalorder %s468, 1
      %s472 = scalar_select %p471, %s468, 1
      %s473 = smul.addr %s470, 2
      %s474 = sadd.s32 %s472, %s473
      %s475 = smul.addr %s474, 8
      %s476 = scalar_lea.vmem %s8, %s475
      %p477 = pneg %p265
      %p478 = pneg %p262
      %p479 = pneg %p291
      %p480 = pneg %p288
      %s481 = smul.u32 16, %s24
      %p482 = scmp.lt.s32.totalorder %s481, 31
      %s483 = scalar_select %p482, %s481, 31
      %s484 = smul.addr %s483, 8
      %s485 = scalar_lea.vmem %s9, %s484
      %s486 = smul.u32 16, %s24
      %p487 = scmp.lt.s32.totalorder %s486, 31
      %s488 = scalar_select %p487, %s486, 31
      %s489 = smul.addr %s488, 8
      %s490 = scalar_lea.vmem %s0, %s489
      %s491 = smul.u32 16, %s24
      %s492 = smul.u32 16, %s24
      %p493 = scmp.lt.s32.totalorder %s492, 31
      %s494 = scalar_select %p493, %s492, 31
      %s495 = smul.addr %s494, 8
      %s496 = scalar_lea.vmem %s1, %s495
      %s497 = smul.u32 16, %s24
      %s498 = smul.u32 16, %s24
      %p499 = scmp.lt.s32.totalorder %s498, 31
      %s500 = scalar_select %p499, %s498, 31
      %s501 = smul.addr %s500, 8
      %s502 = scalar_lea.vmem %s2, %s501
      %s503 = smul.u32 16, %s24
      %s504 = smul.u32 16, %s24
      %p505 = scmp.lt.s32.totalorder %s504, 31
      %s506 = scalar_select %p505, %s504, 31
      %s507 = smul.addr %s506, 8
      %s508 = scalar_lea.vmem %s3, %s507
      %s509 = smul.u32 16, %s24
      %s510 = smul.u32 2, %s25
      %p511 = scmp.lt.s32.totalorder %s510, 1
      %s512 = scalar_select %p511, %s510, 1
      %s513 = scalar_lea.vmem %s4, %s512
      %s514 = smul.u32 2, %s25
      %s515 = smul.u32 16, %s24
      %p516 = scmp.lt.s32.totalorder %s515, 31
      %s517 = scalar_select %p516, %s515, 31
      %s518 = smul.addr %s517, 8
      %s519 = scalar_lea.vmem %s5, %s518
      %s520 = smul.u32 16, %s24
      %s521 = smul.u32 2, %s25
      %p522 = scmp.lt.s32.totalorder %s521, 1
      %s523 = scalar_select %p522, %s521, 1
      %s524 = scalar_lea.vmem %s6, %s523
      %s525 = smul.u32 2, %s25
      %s526 = smul.u32 16, %s24
      %s527 = smul.u32 2, %s25
      %p528 = scmp.lt.s32.totalorder %s526, 31
      %s529 = scalar_select %p528, %s526, 31
      %p530 = scmp.lt.s32.totalorder %s527, 1
      %s531 = scalar_select %p530, %s527, 1
      %s532 = smul.addr %s529, 2
      %s533 = sadd.s32 %s531, %s532
      %s534 = smul.addr %s533, 8
      %s535 = scalar_lea.vmem %s7, %s534
      %s536 = smul.u32 16, %s24
      %s537 = smul.u32 2, %s25
      %s538 = smul.u32 16, %s24
      %s539 = smul.u32 2, %s25
      %p540 = scmp.lt.s32.totalorder %s538, 31
      %s541 = scalar_select %p540, %s538, 31
      %p542 = scmp.lt.s32.totalorder %s539, 1
      %s543 = scalar_select %p542, %s539, 1
      %s544 = smul.addr %s541, 2
      %s545 = sadd.s32 %s543, %s544
      %s546 = smul.addr %s545, 8
      %s547 = scalar_lea.vmem %s8, %s546
      %s548 = smul.u32 16, %s24
      %s549 = smul.u32 2, %s25
      %s550 = smul.u32 16, %s24
      %p551 = scmp.lt.s32.totalorder %s550, 31
      %s552 = scalar_select %p551, %s550, 31
      %s553 = smul.addr %s552, 8
      %s554 = scalar_lea.vmem %s9, %s553
      %s555 = smul.u32 16, %s24
      %p556 = scmp.eq.s32.totalorder %s25, 0
      // Predicated region
      $region57: #{tpu_custom_call.1} parent=55 // pred_check
        %p557 = pneg %p556
      $region58: #{tpu_custom_call.1} parent=55 // pred_check_branch
        %559 = sbr.rel (%p557) target = $region60
      $region59: #{tpu_custom_call.1} parent=55 // pred_region
        %vm560 = vcmask 7168
        %561 = vst.msk [vmem:[%s554] sm:$0xff] %vm560, 0.0
        %562 = vst.msk [vmem:[%s554 + $0x8] sm:$0xff] %vm560, 0.0
        %563 = vst.msk [vmem:[%s554 + $0x10] sm:$0xff] %vm560, 0.0
        %564 = vst.msk [vmem:[%s554 + $0x18] sm:$0xff] %vm560, 0.0
        %565 = vst.msk [vmem:[%s554 + $0x20] sm:$0xff] %vm560, 0.0
        %566 = vst.msk [vmem:[%s554 + $0x28] sm:$0xff] %vm560, 0.0
        %567 = vst.msk [vmem:[%s554 + $0x30] sm:$0xff] %vm560, 0.0
        %568 = vst.msk [vmem:[%s554 + $0x38] sm:$0xff] %vm560, 0.0
        %569 = vst.msk [vmem:[%s554 + $0x40] sm:$0xff] %vm560, 0.0
        %570 = vst.msk [vmem:[%s554 + $0x48] sm:$0xff] %vm560, 0.0
        %571 = vst.msk [vmem:[%s554 + $0x50] sm:$0xff] %vm560, 0.0
        %572 = vst.msk [vmem:[%s554 + $0x58] sm:$0xff] %vm560, 0.0
        %573 = vst.msk [vmem:[%s554 + $0x60] sm:$0xff] %vm560, 0.0
        %574 = vst.msk [vmem:[%s554 + $0x68] sm:$0xff] %vm560, 0.0
        %575 = vst.msk [vmem:[%s554 + $0x70] sm:$0xff] %vm560, 0.0
        %576 = vst.msk [vmem:[%s554 + $0x78] sm:$0xff] %vm560, 0.0
      $region60: #{tpu_custom_call.1} parent=55 // pred_fallthru
        _
      %v577 = vld [vmem:[%s535] sm:$0xff]
      %v578 = vld [vmem:[%s535 + $0x8] sm:$0xff]
      %v579 = vld [vmem:[%s535 + $0x10] sm:$0xff]
      %v580 = vld [vmem:[%s535 + $0x18] sm:$0xff]
      %v581 = vld [vmem:[%s535 + $0x20] sm:$0xff]
      %v582 = vld [vmem:[%s535 + $0x28] sm:$0xff]
      %v583 = vld [vmem:[%s535 + $0x30] sm:$0xff]
      %v584 = vld [vmem:[%s535 + $0x38] sm:$0xff]
      %v585 = vld [vmem:[%s535 + $0x40] sm:$0xff]
      %v586 = vld [vmem:[%s535 + $0x48] sm:$0xff]
      %v587 = vld [vmem:[%s535 + $0x50] sm:$0xff]
      %v588 = vld [vmem:[%s535 + $0x58] sm:$0xff]
      %v589 = vld [vmem:[%s535 + $0x60] sm:$0xff]
      %v590 = vld [vmem:[%s535 + $0x68] sm:$0xff]
      %v591 = vld [vmem:[%s535 + $0x70] sm:$0xff]
      %v592 = vld [vmem:[%s535 + $0x78] sm:$0xff]
      %v593 = vld [vmem:[%s535 + $0x80] sm:$0xff]
      %v594 = vld [vmem:[%s535 + $0x88] sm:$0xff]
      %v595 = vld [vmem:[%s535 + $0x90] sm:$0xff]
      %v596 = vld [vmem:[%s535 + $0x98] sm:$0xff]
      %v597 = vld [vmem:[%s535 + $0xa0] sm:$0xff]
      %v598 = vld [vmem:[%s535 + $0xa8] sm:$0xff]
      %v599 = vld [vmem:[%s535 + $0xb0] sm:$0xff]
      %v600 = vld [vmem:[%s535 + $0xb8] sm:$0xff]
      %v601 = vld [vmem:[%s535 + $0xc0] sm:$0xff]
      %v602 = vld [vmem:[%s535 + $0xc8] sm:$0xff]
      %v603 = vld [vmem:[%s535 + $0xd0] sm:$0xff]
      %v604 = vld [vmem:[%s535 + $0xd8] sm:$0xff]
      %v605 = vld [vmem:[%s535 + $0xe0] sm:$0xff]
      %v606 = vld [vmem:[%s535 + $0xe8] sm:$0xff]
      %v607 = vld [vmem:[%s535 + $0xf0] sm:$0xff]
      %v608 = vld [vmem:[%s535 + $0xf8] sm:$0xff]
      %v609 = vld [vmem:[%s547] sm:$0xff]
      %v610 = vld [vmem:[%s547 + $0x8] sm:$0xff]
      %v611 = vld [vmem:[%s547 + $0x10] sm:$0xff]
      %v612 = vld [vmem:[%s547 + $0x18] sm:$0xff]
      %v613 = vld [vmem:[%s547 + $0x20] sm:$0xff]
      %v614 = vld [vmem:[%s547 + $0x28] sm:$0xff]
      %v615 = vld [vmem:[%s547 + $0x30] sm:$0xff]
      %v616 = vld [vmem:[%s547 + $0x38] sm:$0xff]
      %v617 = vld [vmem:[%s547 + $0x40] sm:$0xff]
      %v618 = vld [vmem:[%s547 + $0x48] sm:$0xff]
      %v619 = vld [vmem:[%s547 + $0x50] sm:$0xff]
      %v620 = vld [vmem:[%s547 + $0x58] sm:$0xff]
      %v621 = vld [vmem:[%s547 + $0x60] sm:$0xff]
      %v622 = vld [vmem:[%s547 + $0x68] sm:$0xff]
      %v623 = vld [vmem:[%s547 + $0x70] sm:$0xff]
      %v624 = vld [vmem:[%s547 + $0x78] sm:$0xff]
      %v625 = vld [vmem:[%s547 + $0x80] sm:$0xff]
      %v626 = vld [vmem:[%s547 + $0x88] sm:$0xff]
      %v627 = vld [vmem:[%s547 + $0x90] sm:$0xff]
      %v628 = vld [vmem:[%s547 + $0x98] sm:$0xff]
      %v629 = vld [vmem:[%s547 + $0xa0] sm:$0xff]
      %v630 = vld [vmem:[%s547 + $0xa8] sm:$0xff]
      %v631 = vld [vmem:[%s547 + $0xb0] sm:$0xff]
      %v632 = vld [vmem:[%s547 + $0xb8] sm:$0xff]
      %v633 = vld [vmem:[%s547 + $0xc0] sm:$0xff]
      %v634 = vld [vmem:[%s547 + $0xc8] sm:$0xff]
      %v635 = vld [vmem:[%s547 + $0xd0] sm:$0xff]
      %v636 = vld [vmem:[%s547 + $0xd8] sm:$0xff]
      %v637 = vld [vmem:[%s547 + $0xe0] sm:$0xff]
      %v638 = vld [vmem:[%s547 + $0xe8] sm:$0xff]
      %v639 = vld [vmem:[%s547 + $0xf0] sm:$0xff]
      %v640 = vld [vmem:[%s547 + $0xf8] sm:$0xff]
      %v641 = vld [vmem:[%s513] sm:$0x3]
      %v642 = vld [vmem:[%s519] sm:$0xff]
      %v643 = vld [vmem:[%s519 + $0x8] sm:$0xff]
      %v644 = vld [vmem:[%s519 + $0x10] sm:$0xff]
      %v645 = vld [vmem:[%s519 + $0x18] sm:$0xff]
      %v646 = vld [vmem:[%s519 + $0x20] sm:$0xff]
      %v647 = vld [vmem:[%s519 + $0x28] sm:$0xff]
      %v648 = vld [vmem:[%s519 + $0x30] sm:$0xff]
      %v649 = vld [vmem:[%s519 + $0x38] sm:$0xff]
      %v650 = vld [vmem:[%s519 + $0x40] sm:$0xff]
      %v651 = vld [vmem:[%s519 + $0x48] sm:$0xff]
      %v652 = vld [vmem:[%s519 + $0x50] sm:$0xff]
      %v653 = vld [vmem:[%s519 + $0x58] sm:$0xff]
      %v654 = vld [vmem:[%s519 + $0x60] sm:$0xff]
      %v655 = vld [vmem:[%s519 + $0x68] sm:$0xff]
      %v656 = vld [vmem:[%s519 + $0x70] sm:$0xff]
      %v657 = vld [vmem:[%s519 + $0x78] sm:$0xff]
      %v658 = vld [vmem:[%s524] sm:$0x3]
      %s659 = smul.u32 %s24, 128
      %v660 = vlaneseq
      %v661 = vshrl.u32 %v660, 7
      %v662 = vadd.s32 %v661, 8
      %v663 = vadd.s32 %v661, 16
      %v664 = vadd.s32 %v661, 24
      %v665 = vadd.s32 %v661, 32
      %v666 = vadd.s32 %v661, 40
      %v667 = vadd.s32 %v661, 48
      %v668 = vadd.s32 %v661, 56
      %v669 = vadd.s32 %v661, 64
      %v670 = vadd.s32 %v661, 72
      %v671 = vadd.s32 %v661, 80
      %v672 = vadd.s32 %v661, 88
      %v673 = vadd.s32 %v661, 96
      %v674 = vadd.s32 %v661, 104
      %v675 = vadd.s32 %v661, 112
      %v676 = vadd.s32 %v661, 120
      %v677 = vstv %s659
      %v678 = vadd.s32 %v677, %v661
      %v679 = vadd.s32 %v677, %v662
      %v680 = vadd.s32 %v677, %v663
      %v681 = vadd.s32 %v677, %v664
      %v682 = vadd.s32 %v677, %v665
      %v683 = vadd.s32 %v677, %v666
      %v684 = vadd.s32 %v677, %v667
      %v685 = vadd.s32 %v677, %v668
      %v686 = vadd.s32 %v677, %v669
      %v687 = vadd.s32 %v677, %v670
      %v688 = vadd.s32 %v677, %v671
      %v689 = vadd.s32 %v677, %v672
      %v690 = vadd.s32 %v677, %v673
      %v691 = vadd.s32 %v677, %v674
      %v692 = vadd.s32 %v677, %v675
      %v693 = vadd.s32 %v677, %v676
      %s694 = smul.u32 %s25, 256
      %v695 = vlaneseq
      %v696 = vand.u32 %v695, 127
      %v697 = vadd.s32 %v696, 128
      %v698 = vstv %s694
      %v699 = vadd.s32 %v698, %v696
      %v700 = vadd.s32 %v698, %v697
      %701 = vset.pattern.permute.xlu0 0
      %702 = vperm.xlu0 %701, %v642
      %v703 = vpop.permute.xlu0 %702
      %704 = vset.pattern.permute.xlu0 0
      %705 = vperm.xlu0 %704, %v643
      %v706 = vpop.permute.xlu0 %705
      %707 = vset.pattern.permute.xlu0 0
      %708 = vperm.xlu0 %707, %v644
      %v709 = vpop.permute.xlu0 %708
      %710 = vset.pattern.permute.xlu0 0
      %711 = vperm.xlu0 %710, %v645
      %v712 = vpop.permute.xlu0 %711
      %713 = vset.pattern.permute.xlu0 0
      %714 = vperm.xlu0 %713, %v646
      %v715 = vpop.permute.xlu0 %714
      %716 = vset.pattern.permute.xlu0 0
      %717 = vperm.xlu0 %716, %v647
      %v718 = vpop.permute.xlu0 %717
      %719 = vset.pattern.permute.xlu0 0
      %720 = vperm.xlu0 %719, %v648
      %v721 = vpop.permute.xlu0 %720
      %722 = vset.pattern.permute.xlu0 0
      %723 = vperm.xlu0 %722, %v649
      %v724 = vpop.permute.xlu0 %723
      %725 = vset.pattern.permute.xlu0 0
      %726 = vperm.xlu0 %725, %v650
      %v727 = vpop.permute.xlu0 %726
      %728 = vset.pattern.permute.xlu0 0
      %729 = vperm.xlu0 %728, %v651
      %v730 = vpop.permute.xlu0 %729
      %731 = vset.pattern.permute.xlu0 0
      %732 = vperm.xlu0 %731, %v652
      %v733 = vpop.permute.xlu0 %732
      %734 = vset.pattern.permute.xlu0 0
      %735 = vperm.xlu0 %734, %v653
      %v736 = vpop.permute.xlu0 %735
      %737 = vset.pattern.permute.xlu0 0
      %738 = vperm.xlu0 %737, %v654
      %v739 = vpop.permute.xlu0 %738
      %740 = vset.pattern.permute.xlu0 0
      %741 = vperm.xlu0 %740, %v655
      %v742 = vpop.permute.xlu0 %741
      %743 = vset.pattern.permute.xlu0 0
      %744 = vperm.xlu0 %743, %v656
      %v745 = vpop.permute.xlu0 %744
      %746 = vset.pattern.permute.xlu0 0
      %747 = vperm.xlu0 %746, %v657
      %v748 = vpop.permute.xlu0 %747
      %v749 = vlaneseq
      %v750 = vshrl.u32 %v749, 7
      %v751 = vsub.s32 0, %v750
      %v752 = vrot.slane %v658, %v751
      %v753 = vlaneseq
      %v754 = vshrl.u32 %v753, 7
      %v755 = vsub.s32 1, %v754
      %v756 = vrot.slane %v658, %v755
      %vm757 = vcmp.eq.s32.totalorder %v703, %v752
      %vm758 = vcmp.eq.s32.totalorder %v703, %v756
      %vm759 = vcmp.eq.s32.totalorder %v706, %v752
      %vm760 = vcmp.eq.s32.totalorder %v706, %v756
      %vm761 = vcmp.eq.s32.totalorder %v709, %v752
      %vm762 = vcmp.eq.s32.totalorder %v709, %v756
      %vm763 = vcmp.eq.s32.totalorder %v712, %v752
      %vm764 = vcmp.eq.s32.totalorder %v712, %v756
      %vm765 = vcmp.eq.s32.totalorder %v715, %v752
      %vm766 = vcmp.eq.s32.totalorder %v715, %v756
      %vm767 = vcmp.eq.s32.totalorder %v718, %v752
      %vm768 = vcmp.eq.s32.totalorder %v718, %v756
      %vm769 = vcmp.eq.s32.totalorder %v721, %v752
      %vm770 = vcmp.eq.s32.totalorder %v721, %v756
      %vm771 = vcmp.eq.s32.totalorder %v724, %v752
      %vm772 = vcmp.eq.s32.totalorder %v724, %v756
      %vm773 = vcmp.eq.s32.totalorder %v727, %v752
      %vm774 = vcmp.eq.s32.totalorder %v727, %v756
      %vm775 = vcmp.eq.s32.totalorder %v730, %v752
      %vm776 = vcmp.eq.s32.totalorder %v730, %v756
      %vm777 = vcmp.eq.s32.totalorder %v733, %v752
      %vm778 = vcmp.eq.s32.totalorder %v733, %v756
      %vm779 = vcmp.eq.s32.totalorder %v736, %v752
      %vm780 = vcmp.eq.s32.totalorder %v736, %v756
      %vm781 = vcmp.eq.s32.totalorder %v739, %v752
      %vm782 = vcmp.eq.s32.totalorder %v739, %v756
      %vm783 = vcmp.eq.s32.totalorder %v742, %v752
      %vm784 = vcmp.eq.s32.totalorder %v742, %v756
      %vm785 = vcmp.eq.s32.totalorder %v745, %v752
      %vm786 = vcmp.eq.s32.totalorder %v745, %v756
      %vm787 = vcmp.eq.s32.totalorder %v748, %v752
      %vm788 = vcmp.eq.s32.totalorder %v748, %v756
      %vm789 = vcmp.ne.s32.totalorder %v678, %v699
      %vm790 = vcmp.ne.s32.totalorder %v678, %v700
      %vm791 = vcmp.ne.s32.totalorder %v679, %v699
      %vm792 = vcmp.ne.s32.totalorder %v679, %v700
      %vm793 = vcmp.ne.s32.totalorder %v680, %v699
      %vm794 = vcmp.ne.s32.totalorder %v680, %v700
      %vm795 = vcmp.ne.s32.totalorder %v681, %v699
      %vm796 = vcmp.ne.s32.totalorder %v681, %v700
      %vm797 = vcmp.ne.s32.totalorder %v682, %v699
      %vm798 = vcmp.ne.s32.totalorder %v682, %v700
      %vm799 = vcmp.ne.s32.totalorder %v683, %v699
      %vm800 = vcmp.ne.s32.totalorder %v683, %v700
      %vm801 = vcmp.ne.s32.totalorder %v684, %v699
      %vm802 = vcmp.ne.s32.totalorder %v684, %v700
      %vm803 = vcmp.ne.s32.totalorder %v685, %v699
      %vm804 = vcmp.ne.s32.totalorder %v685, %v700
      %vm805 = vcmp.ne.s32.totalorder %v686, %v699
      %vm806 = vcmp.ne.s32.totalorder %v686, %v700
      %vm807 = vcmp.ne.s32.totalorder %v687, %v699
      %vm808 = vcmp.ne.s32.totalorder %v687, %v700
      %vm809 = vcmp.ne.s32.totalorder %v688, %v699
      %vm810 = vcmp.ne.s32.totalorder %v688, %v700
      %vm811 = vcmp.ne.s32.totalorder %v689, %v699
      %vm812 = vcmp.ne.s32.totalorder %v689, %v700
      %vm813 = vcmp.ne.s32.totalorder %v690, %v699
      %vm814 = vcmp.ne.s32.totalorder %v690, %v700
      %vm815 = vcmp.ne.s32.totalorder %v691, %v699
      %vm816 = vcmp.ne.s32.totalorder %v691, %v700
      %vm817 = vcmp.ne.s32.totalorder %v692, %v699
      %vm818 = vcmp.ne.s32.totalorder %v692, %v700
      %vm819 = vcmp.ne.s32.totalorder %v693, %v699
      %vm820 = vcmp.ne.s32.totalorder %v693, %v700
      %vm821 = vmand %vm757, %vm789
      %vm822 = vmand %vm758, %vm790
      %vm823 = vmand %vm759, %vm791
      %vm824 = vmand %vm760, %vm792
      %vm825 = vmand %vm761, %vm793
      %vm826 = vmand %vm762, %vm794
      %vm827 = vmand %vm763, %vm795
      %vm828 = vmand %vm764, %vm796
      %vm829 = vmand %vm765, %vm797
      %vm830 = vmand %vm766, %vm798
      %vm831 = vmand %vm767, %vm799
      %vm832 = vmand %vm768, %vm800
      %vm833 = vmand %vm769, %vm801
      %vm834 = vmand %vm770, %vm802
      %vm835 = vmand %vm771, %vm803
      %vm836 = vmand %vm772, %vm804
      %vm837 = vmand %vm773, %vm805
      %vm838 = vmand %vm774, %vm806
      %vm839 = vmand %vm775, %vm807
      %vm840 = vmand %vm776, %vm808
      %vm841 = vmand %vm777, %vm809
      %vm842 = vmand %vm778, %vm810
      %vm843 = vmand %vm779, %vm811
      %vm844 = vmand %vm780, %vm812
      %vm845 = vmand %vm781, %vm813
      %vm846 = vmand %vm782, %vm814
      %vm847 = vmand %vm783, %vm815
      %vm848 = vmand %vm784, %vm816
      %vm849 = vmand %vm785, %vm817
      %vm850 = vmand %vm786, %vm818
      %vm851 = vmand %vm787, %vm819
      %vm852 = vmand %vm788, %vm820
      %vm853 = vcmp.eq.s32.totalorder %v641, 0
      %vm854 = vcmp.eq.s32.totalorder %v641, 1
      %v855 = vld [vmem:[%s490] sm:$0xff]
      %v856 = vld [vmem:[%s490 + $0x8] sm:$0xff]
      %v857 = vld [vmem:[%s490 + $0x10] sm:$0xff]
      %v858 = vld [vmem:[%s490 + $0x18] sm:$0xff]
      %v859 = vld [vmem:[%s490 + $0x20] sm:$0xff]
      %v860 = vld [vmem:[%s490 + $0x28] sm:$0xff]
      %v861 = vld [vmem:[%s490 + $0x30] sm:$0xff]
      %v862 = vld [vmem:[%s490 + $0x38] sm:$0xff]
      %v863 = vld [vmem:[%s490 + $0x40] sm:$0xff]
      %v864 = vld [vmem:[%s490 + $0x48] sm:$0xff]
      %v865 = vld [vmem:[%s490 + $0x50] sm:$0xff]
      %v866 = vld [vmem:[%s490 + $0x58] sm:$0xff]
      %v867 = vld [vmem:[%s490 + $0x60] sm:$0xff]
      %v868 = vld [vmem:[%s490 + $0x68] sm:$0xff]
      %v869 = vld [vmem:[%s490 + $0x70] sm:$0xff]
      %v870 = vld [vmem:[%s490 + $0x78] sm:$0xff]
      %v871 = vsel %vm854, 1, 0
      %v872 = vlaneseq
      %v873 = vshrl.u32 %v872, 7
      %v874 = vsub.s32 0, %v873
      %v875 = vrot.slane %v871, %v874
      %v876 = vlaneseq
      %v877 = vshrl.u32 %v876, 7
      %v878 = vsub.s32 1, %v877
      %v879 = vrot.slane %v871, %v878
      %vm880 = vcmp.eq.s32.totalorder %v875, 1
      %vm881 = vcmp.eq.s32.totalorder %v879, 1
      %883 = vset.pattern.permute.xlu0 1
      %884 = vperm.xlu0 %883, %v855
      %v885 = vpop.permute.xlu0 %884
      %888 = vset.pattern.permute.xlu0 1
      %889 = vperm.xlu0 %888, %v856
      %v890 = vpop.permute.xlu0 %889
      %893 = vset.pattern.permute.xlu0 1
      %894 = vperm.xlu0 %893, %v857
      %v895 = vpop.permute.xlu0 %894
      %898 = vset.pattern.permute.xlu0 1
      %899 = vperm.xlu0 %898, %v858
      %v900 = vpop.permute.xlu0 %899
      %903 = vset.pattern.permute.xlu0 1
      %904 = vperm.xlu0 %903, %v859
      %v905 = vpop.permute.xlu0 %904
      %908 = vset.pattern.permute.xlu0 1
      %909 = vperm.xlu0 %908, %v860
      %v910 = vpop.permute.xlu0 %909
      %913 = vset.pattern.permute.xlu0 1
      %914 = vperm.xlu0 %913, %v861
      %v915 = vpop.permute.xlu0 %914
      %918 = vset.pattern.permute.xlu0 1
      %919 = vperm.xlu0 %918, %v862
      %v920 = vpop.permute.xlu0 %919
      %923 = vset.pattern.permute.xlu0 1
      %924 = vperm.xlu0 %923, %v863
      %v925 = vpop.permute.xlu0 %924
      %928 = vset.pattern.permute.xlu0 1
      %929 = vperm.xlu0 %928, %v864
      %v930 = vpop.permute.xlu0 %929
      %933 = vset.pattern.permute.xlu0 1
      %934 = vperm.xlu0 %933, %v865
      %v935 = vpop.permute.xlu0 %934
      %938 = vset.pattern.permute.xlu0 1
      %939 = vperm.xlu0 %938, %v866
      %v940 = vpop.permute.xlu0 %939
      %943 = vset.pattern.permute.xlu0 1
      %944 = vperm.xlu0 %943, %v867
      %v945 = vpop.permute.xlu0 %944
      %948 = vset.pattern.permute.xlu0 1
      %949 = vperm.xlu0 %948, %v868
      %v950 = vpop.permute.xlu0 %949
      %953 = vset.pattern.permute.xlu0 1
      %954 = vperm.xlu0 %953, %v869
      %v955 = vpop.permute.xlu0 %954
      %958 = vset.pattern.permute.xlu0 1
      %959 = vperm.xlu0 %958, %v870
      %v960 = vpop.permute.xlu0 %959
      %962 = vset.pattern.permute.xlu0 2
      %963 = vperm.xlu0 %962, %v855
      %v964 = vpop.permute.xlu0 %963
      %966 = vset.pattern.permute.xlu0 2
      %967 = vperm.xlu0 %966, %v856
      %v968 = vpop.permute.xlu0 %967
      %970 = vset.pattern.permute.xlu0 2
      %971 = vperm.xlu0 %970, %v857
      %v972 = vpop.permute.xlu0 %971
      %974 = vset.pattern.permute.xlu0 2
      %975 = vperm.xlu0 %974, %v858
      %v976 = vpop.permute.xlu0 %975
      %978 = vset.pattern.permute.xlu0 2
      %979 = vperm.xlu0 %978, %v859
      %v980 = vpop.permute.xlu0 %979
      %982 = vset.pattern.permute.xlu0 2
      %983 = vperm.xlu0 %982, %v860
      %v984 = vpop.permute.xlu0 %983
      %986 = vset.pattern.permute.xlu0 2
      %987 = vperm.xlu0 %986, %v861
      %v988 = vpop.permute.xlu0 %987
      %990 = vset.pattern.permute.xlu0 2
      %991 = vperm.xlu0 %990, %v862
      %v992 = vpop.permute.xlu0 %991
      %994 = vset.pattern.permute.xlu0 2
      %995 = vperm.xlu0 %994, %v863
      %v996 = vpop.permute.xlu0 %995
      %998 = vset.pattern.permute.xlu0 2
      %999 = vperm.xlu0 %998, %v864
      %v1000 = vpop.permute.xlu0 %999
      %1002 = vset.pattern.permute.xlu0 2
      %1003 = vperm.xlu0 %1002, %v865
      %v1004 = vpop.permute.xlu0 %1003
      %1006 = vset.pattern.permute.xlu0 2
      %1007 = vperm.xlu0 %1006, %v866
      %v1008 = vpop.permute.xlu0 %1007
      %1010 = vset.pattern.permute.xlu0 2
      %1011 = vperm.xlu0 %1010, %v867
      %v1012 = vpop.permute.xlu0 %1011
      %1014 = vset.pattern.permute.xlu0 2
      %1015 = vperm.xlu0 %1014, %v868
      %v1016 = vpop.permute.xlu0 %1015
      %1018 = vset.pattern.permute.xlu0 2
      %1019 = vperm.xlu0 %1018, %v869
      %v1020 = vpop.permute.xlu0 %1019
      %1022 = vset.pattern.permute.xlu0 2
      %1023 = vperm.xlu0 %1022, %v870
      %v1024 = vpop.permute.xlu0 %1023
      %v1026 = vsel %vm880, %v885, %v964
      %v1027 = vsel %vm881, %v885, %v964
      %v1028 = vsel %vm880, %v890, %v968
      %v1029 = vsel %vm881, %v890, %v968
      %v1030 = vsel %vm880, %v895, %v972
      %v1031 = vsel %vm881, %v895, %v972
      %v1032 = vsel %vm880, %v900, %v976
      %v1033 = vsel %vm881, %v900, %v976
      %v1034 = vsel %vm880, %v905, %v980
      %v1035 = vsel %vm881, %v905, %v980
      %v1036 = vsel %vm880, %v910, %v984
      %v1037 = vsel %vm881, %v910, %v984
      %v1038 = vsel %vm880, %v915, %v988
      %v1039 = vsel %vm881, %v915, %v988
      %v1040 = vsel %vm880, %v920, %v992
      %v1041 = vsel %vm881, %v920, %v992
      %v1042 = vsel %vm880, %v925, %v996
      %v1043 = vsel %vm881, %v925, %v996
      %v1044 = vsel %vm880, %v930, %v1000
      %v1045 = vsel %vm881, %v930, %v1000
      %v1046 = vsel %vm880, %v935, %v1004
      %v1047 = vsel %vm881, %v935, %v1004
      %v1048 = vsel %vm880, %v940, %v1008
      %v1049 = vsel %vm881, %v940, %v1008
      %v1050 = vsel %vm880, %v945, %v1012
      %v1051 = vsel %vm881, %v945, %v1012
      %v1052 = vsel %vm880, %v950, %v1016
      %v1053 = vsel %vm881, %v950, %v1016
      %v1054 = vsel %vm880, %v955, %v1020
      %v1055 = vsel %vm881, %v955, %v1020
      %v1056 = vsel %vm880, %v960, %v1024
      %v1057 = vsel %vm881, %v960, %v1024
      %v1058 = vsel %vm853, 1, 0
      %v1059 = vlaneseq
      %v1060 = vshrl.u32 %v1059, 7
      %v1061 = vsub.s32 0, %v1060
      %v1062 = vrot.slane %v1058, %v1061
      %v1063 = vlaneseq
      %v1064 = vshrl.u32 %v1063, 7
      %v1065 = vsub.s32 1, %v1064
      %v1066 = vrot.slane %v1058, %v1065
      %vm1067 = vcmp.eq.s32.totalorder %v1062, 1
      %vm1068 = vcmp.eq.s32.totalorder %v1066, 1
      %1069 = vset.pattern.permute.xlu0 0
      %1070 = vperm.xlu0 %1069, %v855
      %v1071 = vpop.permute.xlu0 %1070
      %1073 = vset.pattern.permute.xlu0 0
      %1074 = vperm.xlu0 %1073, %v856
      %v1075 = vpop.permute.xlu0 %1074
      %1077 = vset.pattern.permute.xlu0 0
      %1078 = vperm.xlu0 %1077, %v857
      %v1079 = vpop.permute.xlu0 %1078
      %1081 = vset.pattern.permute.xlu0 0
      %1082 = vperm.xlu0 %1081, %v858
      %v1083 = vpop.permute.xlu0 %1082
      %1085 = vset.pattern.permute.xlu0 0
      %1086 = vperm.xlu0 %1085, %v859
      %v1087 = vpop.permute.xlu0 %1086
      %1089 = vset.pattern.permute.xlu0 0
      %1090 = vperm.xlu0 %1089, %v860
      %v1091 = vpop.permute.xlu0 %1090
      %1093 = vset.pattern.permute.xlu0 0
      %1094 = vperm.xlu0 %1093, %v861
      %v1095 = vpop.permute.xlu0 %1094
      %1097 = vset.pattern.permute.xlu0 0
      %1098 = vperm.xlu0 %1097, %v862
      %v1099 = vpop.permute.xlu0 %1098
      %1101 = vset.pattern.permute.xlu0 0
      %1102 = vperm.xlu0 %1101, %v863
      %v1103 = vpop.permute.xlu0 %1102
      %1105 = vset.pattern.permute.xlu0 0
      %1106 = vperm.xlu0 %1105, %v864
      %v1107 = vpop.permute.xlu0 %1106
      %1109 = vset.pattern.permute.xlu0 0
      %1110 = vperm.xlu0 %1109, %v865
      %v1111 = vpop.permute.xlu0 %1110
      %1113 = vset.pattern.permute.xlu0 0
      %1114 = vperm.xlu0 %1113, %v866
      %v1115 = vpop.permute.xlu0 %1114
      %1117 = vset.pattern.permute.xlu0 0
      %1118 = vperm.xlu0 %1117, %v867
      %v1119 = vpop.permute.xlu0 %1118
      %1121 = vset.pattern.permute.xlu0 0
      %1122 = vperm.xlu0 %1121, %v868
      %v1123 = vpop.permute.xlu0 %1122
      %1125 = vset.pattern.permute.xlu0 0
      %1126 = vperm.xlu0 %1125, %v869
      %v1127 = vpop.permute.xlu0 %1126
      %1129 = vset.pattern.permute.xlu0 0
      %1130 = vperm.xlu0 %1129, %v870
      %v1131 = vpop.permute.xlu0 %1130
      %v1133 = vsel %vm1067, %v1071, %v1026
      %v1134 = vsel %vm1068, %v1071, %v1027
      %v1135 = vsel %vm1067, %v1075, %v1028
      %v1136 = vsel %vm1068, %v1075, %v1029
      %v1137 = vsel %vm1067, %v1079, %v1030
      %v1138 = vsel %vm1068, %v1079, %v1031
      %v1139 = vsel %vm1067, %v1083, %v1032
      %v1140 = vsel %vm1068, %v1083, %v1033
      %v1141 = vsel %vm1067, %v1087, %v1034
      %v1142 = vsel %vm1068, %v1087, %v1035
      %v1143 = vsel %vm1067, %v1091, %v1036
      %v1144 = vsel %vm1068, %v1091, %v1037
      %v1145 = vsel %vm1067, %v1095, %v1038
      %v1146 = vsel %vm1068, %v1095, %v1039
      %v1147 = vsel %vm1067, %v1099, %v1040
      %v1148 = vsel %vm1068, %v1099, %v1041
      %v1149 = vsel %vm1067, %v1103, %v1042
      %v1150 = vsel %vm1068, %v1103, %v1043
      %v1151 = vsel %vm1067, %v1107, %v1044
      %v1152 = vsel %vm1068, %v1107, %v1045
      %v1153 = vsel %vm1067, %v1111, %v1046
      %v1154 = vsel %vm1068, %v1111, %v1047
      %v1155 = vsel %vm1067, %v1115, %v1048
      %v1156 = vsel %vm1068, %v1115, %v1049
      %v1157 = vsel %vm1067, %v1119, %v1050
      %v1158 = vsel %vm1068, %v1119, %v1051
      %v1159 = vsel %vm1067, %v1123, %v1052
      %v1160 = vsel %vm1068, %v1123, %v1053
      %v1161 = vsel %vm1067, %v1127, %v1054
      %v1162 = vsel %vm1068, %v1127, %v1055
      %v1163 = vsel %vm1067, %v1131, %v1056
      %v1164 = vsel %vm1068, %v1131, %v1057
      %v1165 = vld [vmem:[%s496] sm:$0xff]
      %v1166 = vld [vmem:[%s496 + $0x8] sm:$0xff]
      %v1167 = vld [vmem:[%s496 + $0x10] sm:$0xff]
      %v1168 = vld [vmem:[%s496 + $0x18] sm:$0xff]
      %v1169 = vld [vmem:[%s496 + $0x20] sm:$0xff]
      %v1170 = vld [vmem:[%s496 + $0x28] sm:$0xff]
      %v1171 = vld [vmem:[%s496 + $0x30] sm:$0xff]
      %v1172 = vld [vmem:[%s496 + $0x38] sm:$0xff]
      %v1173 = vld [vmem:[%s496 + $0x40] sm:$0xff]
      %v1174 = vld [vmem:[%s496 + $0x48] sm:$0xff]
      %v1175 = vld [vmem:[%s496 + $0x50] sm:$0xff]
      %v1176 = vld [vmem:[%s496 + $0x58] sm:$0xff]
      %v1177 = vld [vmem:[%s496 + $0x60] sm:$0xff]
      %v1178 = vld [vmem:[%s496 + $0x68] sm:$0xff]
      %v1179 = vld [vmem:[%s496 + $0x70] sm:$0xff]
      %v1180 = vld [vmem:[%s496 + $0x78] sm:$0xff]
      %1182 = vset.pattern.permute.xlu0 1
      %1183 = vperm.xlu0 %1182, %v1165
      %v1184 = vpop.permute.xlu0 %1183
      %1187 = vset.pattern.permute.xlu0 1
      %1188 = vperm.xlu0 %1187, %v1166
      %v1189 = vpop.permute.xlu0 %1188
      %1192 = vset.pattern.permute.xlu0 1
      %1193 = vperm.xlu0 %1192, %v1167
      %v1194 = vpop.permute.xlu0 %1193
      %1197 = vset.pattern.permute.xlu0 1
      %1198 = vperm.xlu0 %1197, %v1168
      %v1199 = vpop.permute.xlu0 %1198
      %1202 = vset.pattern.permute.xlu0 1
      %1203 = vperm.xlu0 %1202, %v1169
      %v1204 = vpop.permute.xlu0 %1203
      %1207 = vset.pattern.permute.xlu0 1
      %1208 = vperm.xlu0 %1207, %v1170
      %v1209 = vpop.permute.xlu0 %1208
      %1212 = vset.pattern.permute.xlu0 1
      %1213 = vperm.xlu0 %1212, %v1171
      %v1214 = vpop.permute.xlu0 %1213
      %1217 = vset.pattern.permute.xlu0 1
      %1218 = vperm.xlu0 %1217, %v1172
      %v1219 = vpop.permute.xlu0 %1218
      %1222 = vset.pattern.permute.xlu0 1
      %1223 = vperm.xlu0 %1222, %v1173
      %v1224 = vpop.permute.xlu0 %1223
      %1227 = vset.pattern.permute.xlu0 1
      %1228 = vperm.xlu0 %1227, %v1174
      %v1229 = vpop.permute.xlu0 %1228
      %1232 = vset.pattern.permute.xlu0 1
      %1233 = vperm.xlu0 %1232, %v1175
      %v1234 = vpop.permute.xlu0 %1233
      %1237 = vset.pattern.permute.xlu0 1
      %1238 = vperm.xlu0 %1237, %v1176
      %v1239 = vpop.permute.xlu0 %1238
      %1242 = vset.pattern.permute.xlu0 1
      %1243 = vperm.xlu0 %1242, %v1177
      %v1244 = vpop.permute.xlu0 %1243
      %1247 = vset.pattern.permute.xlu0 1
      %1248 = vperm.xlu0 %1247, %v1178
      %v1249 = vpop.permute.xlu0 %1248
      %1252 = vset.pattern.permute.xlu0 1
      %1253 = vperm.xlu0 %1252, %v1179
      %v1254 = vpop.permute.xlu0 %1253
      %1257 = vset.pattern.permute.xlu0 1
      %1258 = vperm.xlu0 %1257, %v1180
      %v1259 = vpop.permute.xlu0 %1258
      %1261 = vset.pattern.permute.xlu0 2
      %1262 = vperm.xlu0 %1261, %v1165
      %v1263 = vpop.permute.xlu0 %1262
      %1265 = vset.pattern.permute.xlu0 2
      %1266 = vperm.xlu0 %1265, %v1166
      %v1267 = vpop.permute.xlu0 %1266
      %1269 = vset.pattern.permute.xlu0 2
      %1270 = vperm.xlu0 %1269, %v1167
      %v1271 = vpop.permute.xlu0 %1270
      %1273 = vset.pattern.permute.xlu0 2
      %1274 = vperm.xlu0 %1273, %v1168
      %v1275 = vpop.permute.xlu0 %1274
      %1277 = vset.pattern.permute.xlu0 2
      %1278 = vperm.xlu0 %1277, %v1169
      %v1279 = vpop.permute.xlu0 %1278
      %1281 = vset.pattern.permute.xlu0 2
      %1282 = vperm.xlu0 %1281, %v1170
      %v1283 = vpop.permute.xlu0 %1282
      %1285 = vset.pattern.permute.xlu0 2
      %1286 = vperm.xlu0 %1285, %v1171
      %v1287 = vpop.permute.xlu0 %1286
      %1289 = vset.pattern.permute.xlu0 2
      %1290 = vperm.xlu0 %1289, %v1172
      %v1291 = vpop.permute.xlu0 %1290
      %1293 = vset.pattern.permute.xlu0 2
      %1294 = vperm.xlu0 %1293, %v1173
      %v1295 = vpop.permute.xlu0 %1294
      %1297 = vset.pattern.permute.xlu0 2
      %1298 = vperm.xlu0 %1297, %v1174
      %v1299 = vpop.permute.xlu0 %1298
      %1301 = vset.pattern.permute.xlu0 2
      %1302 = vperm.xlu0 %1301, %v1175
      %v1303 = vpop.permute.xlu0 %1302
      %1305 = vset.pattern.permute.xlu0 2
      %1306 = vperm.xlu0 %1305, %v1176
      %v1307 = vpop.permute.xlu0 %1306
      %1309 = vset.pattern.permute.xlu0 2
      %1310 = vperm.xlu0 %1309, %v1177
      %v1311 = vpop.permute.xlu0 %1310
      %1313 = vset.pattern.permute.xlu0 2
      %1314 = vperm.xlu0 %1313, %v1178
      %v1315 = vpop.permute.xlu0 %1314
      %1317 = vset.pattern.permute.xlu0 2
      %1318 = vperm.xlu0 %1317, %v1179
      %v1319 = vpop.permute.xlu0 %1318
      %1321 = vset.pattern.permute.xlu0 2
      %1322 = vperm.xlu0 %1321, %v1180
      %v1323 = vpop.permute.xlu0 %1322
      %v1325 = vsel %vm880, %v1184, %v1263
      %v1326 = vsel %vm881, %v1184, %v1263
      %v1327 = vsel %vm880, %v1189, %v1267
      %v1328 = vsel %vm881, %v1189, %v1267
      %v1329 = vsel %vm880, %v1194, %v1271
      %v1330 = vsel %vm881, %v1194, %v1271
      %v1331 = vsel %vm880, %v1199, %v1275
      %v1332 = vsel %vm881, %v1199, %v1275
      %v1333 = vsel %vm880, %v1204, %v1279
      %v1334 = vsel %vm881, %v1204, %v1279
      %v1335 = vsel %vm880, %v1209, %v1283
      %v1336 = vsel %vm881, %v1209, %v1283
      %v1337 = vsel %vm880, %v1214, %v1287
      %v1338 = vsel %vm881, %v1214, %v1287
      %v1339 = vsel %vm880, %v1219, %v1291
      %v1340 = vsel %vm881, %v1219, %v1291
      %v1341 = vsel %vm880, %v1224, %v1295
      %v1342 = vsel %vm881, %v1224, %v1295
      %v1343 = vsel %vm880, %v1229, %v1299
      %v1344 = vsel %vm881, %v1229, %v1299
      %v1345 = vsel %vm880, %v1234, %v1303
      %v1346 = vsel %vm881, %v1234, %v1303
      %v1347 = vsel %vm880, %v1239, %v1307
      %v1348 = vsel %vm881, %v1239, %v1307
      %v1349 = vsel %vm880, %v1244, %v1311
      %v1350 = vsel %vm881, %v1244, %v1311
      %v1351 = vsel %vm880, %v1249, %v1315
      %v1352 = vsel %vm881, %v1249, %v1315
      %v1353 = vsel %vm880, %v1254, %v1319
      %v1354 = vsel %vm881, %v1254, %v1319
      %v1355 = vsel %vm880, %v1259, %v1323
      %v1356 = vsel %vm881, %v1259, %v1323
      %1357 = vset.pattern.permute.xlu0 0
      %1358 = vperm.xlu0 %1357, %v1165
      %v1359 = vpop.permute.xlu0 %1358
      %1361 = vset.pattern.permute.xlu0 0
      %1362 = vperm.xlu0 %1361, %v1166
      %v1363 = vpop.permute.xlu0 %1362
      %1365 = vset.pattern.permute.xlu0 0
      %1366 = vperm.xlu0 %1365, %v1167
      %v1367 = vpop.permute.xlu0 %1366
      %1369 = vset.pattern.permute.xlu0 0
      %1370 = vperm.xlu0 %1369, %v1168
      %v1371 = vpop.permute.xlu0 %1370
      %1373 = vset.pattern.permute.xlu0 0
      %1374 = vperm.xlu0 %1373, %v1169
      %v1375 = vpop.permute.xlu0 %1374
      %1377 = vset.pattern.permute.xlu0 0
      %1378 = vperm.xlu0 %1377, %v1170
      %v1379 = vpop.permute.xlu0 %1378
      %1381 = vset.pattern.permute.xlu0 0
      %1382 = vperm.xlu0 %1381, %v1171
      %v1383 = vpop.permute.xlu0 %1382
      %1385 = vset.pattern.permute.xlu0 0
      %1386 = vperm.xlu0 %1385, %v1172
      %v1387 = vpop.permute.xlu0 %1386
      %1389 = vset.pattern.permute.xlu0 0
      %1390 = vperm.xlu0 %1389, %v1173
      %v1391 = vpop.permute.xlu0 %1390
      %1393 = vset.pattern.permute.xlu0 0
      %1394 = vperm.xlu0 %1393, %v1174
      %v1395 = vpop.permute.xlu0 %1394
      %1397 = vset.pattern.permute.xlu0 0
      %1398 = vperm.xlu0 %1397, %v1175
      %v1399 = vpop.permute.xlu0 %1398
      %1401 = vset.pattern.permute.xlu0 0
      %1402 = vperm.xlu0 %1401, %v1176
      %v1403 = vpop.permute.xlu0 %1402
      %1405 = vset.pattern.permute.xlu0 0
      %1406 = vperm.xlu0 %1405, %v1177
      %v1407 = vpop.permute.xlu0 %1406
      %1409 = vset.pattern.permute.xlu0 0
      %1410 = vperm.xlu0 %1409, %v1178
      %v1411 = vpop.permute.xlu0 %1410
      %1413 = vset.pattern.permute.xlu0 0
      %1414 = vperm.xlu0 %1413, %v1179
      %v1415 = vpop.permute.xlu0 %1414
      %1417 = vset.pattern.permute.xlu0 0
      %1418 = vperm.xlu0 %1417, %v1180
      %v1419 = vpop.permute.xlu0 %1418
      %v1421 = vsel %vm1067, %v1359, %v1325
      %v1422 = vsel %vm1068, %v1359, %v1326
      %v1423 = vsel %vm1067, %v1363, %v1327
      %v1424 = vsel %vm1068, %v1363, %v1328
      %v1425 = vsel %vm1067, %v1367, %v1329
      %v1426 = vsel %vm1068, %v1367, %v1330
      %v1427 = vsel %vm1067, %v1371, %v1331
      %v1428 = vsel %vm1068, %v1371, %v1332
      %v1429 = vsel %vm1067, %v1375, %v1333
      %v1430 = vsel %vm1068, %v1375, %v1334
      %v1431 = vsel %vm1067, %v1379, %v1335
      %v1432 = vsel %vm1068, %v1379, %v1336
      %v1433 = vsel %vm1067, %v1383, %v1337
      %v1434 = vsel %vm1068, %v1383, %v1338
      %v1435 = vsel %vm1067, %v1387, %v1339
      %v1436 = vsel %vm1068, %v1387, %v1340
      %v1437 = vsel %vm1067, %v1391, %v1341
      %v1438 = vsel %vm1068, %v1391, %v1342
      %v1439 = vsel %vm1067, %v1395, %v1343
      %v1440 = vsel %vm1068, %v1395, %v1344
      %v1441 = vsel %vm1067, %v1399, %v1345
      %v1442 = vsel %vm1068, %v1399, %v1346
      %v1443 = vsel %vm1067, %v1403, %v1347
      %v1444 = vsel %vm1068, %v1403, %v1348
      %v1445 = vsel %vm1067, %v1407, %v1349
      %v1446 = vsel %vm1068, %v1407, %v1350
      %v1447 = vsel %vm1067, %v1411, %v1351
      %v1448 = vsel %vm1068, %v1411, %v1352
      %v1449 = vsel %vm1067, %v1415, %v1353
      %v1450 = vsel %vm1068, %v1415, %v1354
      %v1451 = vsel %vm1067, %v1419, %v1355
      %v1452 = vsel %vm1068, %v1419, %v1356
      %v1453 = vld [vmem:[%s502] sm:$0xff]
      %v1454 = vld [vmem:[%s502 + $0x8] sm:$0xff]
      %v1455 = vld [vmem:[%s502 + $0x10] sm:$0xff]
      %v1456 = vld [vmem:[%s502 + $0x18] sm:$0xff]
      %v1457 = vld [vmem:[%s502 + $0x20] sm:$0xff]
      %v1458 = vld [vmem:[%s502 + $0x28] sm:$0xff]
      %v1459 = vld [vmem:[%s502 + $0x30] sm:$0xff]
      %v1460 = vld [vmem:[%s502 + $0x38] sm:$0xff]
      %v1461 = vld [vmem:[%s502 + $0x40] sm:$0xff]
      %v1462 = vld [vmem:[%s502 + $0x48] sm:$0xff]
      %v1463 = vld [vmem:[%s502 + $0x50] sm:$0xff]
      %v1464 = vld [vmem:[%s502 + $0x58] sm:$0xff]
      %v1465 = vld [vmem:[%s502 + $0x60] sm:$0xff]
      %v1466 = vld [vmem:[%s502 + $0x68] sm:$0xff]
      %v1467 = vld [vmem:[%s502 + $0x70] sm:$0xff]
      %v1468 = vld [vmem:[%s502 + $0x78] sm:$0xff]
      %1470 = vset.pattern.permute.xlu0 1
      %1471 = vperm.xlu0 %1470, %v1453
      %v1472 = vpop.permute.xlu0 %1471
      %1475 = vset.pattern.permute.xlu0 1
      %1476 = vperm.xlu0 %1475, %v1454
      %v1477 = vpop.permute.xlu0 %1476
      %1480 = vset.pattern.permute.xlu0 1
      %1481 = vperm.xlu0 %1480, %v1455
      %v1482 = vpop.permute.xlu0 %1481
      %1485 = vset.pattern.permute.xlu0 1
      %1486 = vperm.xlu0 %1485, %v1456
      %v1487 = vpop.permute.xlu0 %1486
      %1490 = vset.pattern.permute.xlu0 1
      %1491 = vperm.xlu0 %1490, %v1457
      %v1492 = vpop.permute.xlu0 %1491
      %1495 = vset.pattern.permute.xlu0 1
      %1496 = vperm.xlu0 %1495, %v1458
      %v1497 = vpop.permute.xlu0 %1496
      %1500 = vset.pattern.permute.xlu0 1
      %1501 = vperm.xlu0 %1500, %v1459
      %v1502 = vpop.permute.xlu0 %1501
      %1505 = vset.pattern.permute.xlu0 1
      %1506 = vperm.xlu0 %1505, %v1460
      %v1507 = vpop.permute.xlu0 %1506
      %1510 = vset.pattern.permute.xlu0 1
      %1511 = vperm.xlu0 %1510, %v1461
      %v1512 = vpop.permute.xlu0 %1511
      %1515 = vset.pattern.permute.xlu0 1
      %1516 = vperm.xlu0 %1515, %v1462
      %v1517 = vpop.permute.xlu0 %1516
      %1520 = vset.pattern.permute.xlu0 1
      %1521 = vperm.xlu0 %1520, %v1463
      %v1522 = vpop.permute.xlu0 %1521
      %1525 = vset.pattern.permute.xlu0 1
      %1526 = vperm.xlu0 %1525, %v1464
      %v1527 = vpop.permute.xlu0 %1526
      %1530 = vset.pattern.permute.xlu0 1
      %1531 = vperm.xlu0 %1530, %v1465
      %v1532 = vpop.permute.xlu0 %1531
      %1535 = vset.pattern.permute.xlu0 1
      %1536 = vperm.xlu0 %1535, %v1466
      %v1537 = vpop.permute.xlu0 %1536
      %1540 = vset.pattern.permute.xlu0 1
      %1541 = vperm.xlu0 %1540, %v1467
      %v1542 = vpop.permute.xlu0 %1541
      %1545 = vset.pattern.permute.xlu0 1
      %1546 = vperm.xlu0 %1545, %v1468
      %v1547 = vpop.permute.xlu0 %1546
      %1549 = vset.pattern.permute.xlu0 2
      %1550 = vperm.xlu0 %1549, %v1453
      %v1551 = vpop.permute.xlu0 %1550
      %1553 = vset.pattern.permute.xlu0 2
      %1554 = vperm.xlu0 %1553, %v1454
      %v1555 = vpop.permute.xlu0 %1554
      %1557 = vset.pattern.permute.xlu0 2
      %1558 = vperm.xlu0 %1557, %v1455
      %v1559 = vpop.permute.xlu0 %1558
      %1561 = vset.pattern.permute.xlu0 2
      %1562 = vperm.xlu0 %1561, %v1456
      %v1563 = vpop.permute.xlu0 %1562
      %1565 = vset.pattern.permute.xlu0 2
      %1566 = vperm.xlu0 %1565, %v1457
      %v1567 = vpop.permute.xlu0 %1566
      %1569 = vset.pattern.permute.xlu0 2
      %1570 = vperm.xlu0 %1569, %v1458
      %v1571 = vpop.permute.xlu0 %1570
      %1573 = vset.pattern.permute.xlu0 2
      %1574 = vperm.xlu0 %1573, %v1459
      %v1575 = vpop.permute.xlu0 %1574
      %1577 = vset.pattern.permute.xlu0 2
      %1578 = vperm.xlu0 %1577, %v1460
      %v1579 = vpop.permute.xlu0 %1578
      %1581 = vset.pattern.permute.xlu0 2
      %1582 = vperm.xlu0 %1581, %v1461
      %v1583 = vpop.permute.xlu0 %1582
      %1585 = vset.pattern.permute.xlu0 2
      %1586 = vperm.xlu0 %1585, %v1462
      %v1587 = vpop.permute.xlu0 %1586
      %1589 = vset.pattern.permute.xlu0 2
      %1590 = vperm.xlu0 %1589, %v1463
      %v1591 = vpop.permute.xlu0 %1590
      %1593 = vset.pattern.permute.xlu0 2
      %1594 = vperm.xlu0 %1593, %v1464
      %v1595 = vpop.permute.xlu0 %1594
      %1597 = vset.pattern.permute.xlu0 2
      %1598 = vperm.xlu0 %1597, %v1465
      %v1599 = vpop.permute.xlu0 %1598
      %1601 = vset.pattern.permute.xlu0 2
      %1602 = vperm.xlu0 %1601, %v1466
      %v1603 = vpop.permute.xlu0 %1602
      %1605 = vset.pattern.permute.xlu0 2
      %1606 = vperm.xlu0 %1605, %v1467
      %v1607 = vpop.permute.xlu0 %1606
      %1609 = vset.pattern.permute.xlu0 2
      %1610 = vperm.xlu0 %1609, %v1468
      %v1611 = vpop.permute.xlu0 %1610
      %v1613 = vsel %vm880, %v1472, %v1551
      %v1614 = vsel %vm881, %v1472, %v1551
      %v1615 = vsel %vm880, %v1477, %v1555
      %v1616 = vsel %vm881, %v1477, %v1555
      %v1617 = vsel %vm880, %v1482, %v1559
      %v1618 = vsel %vm881, %v1482, %v1559
      %v1619 = vsel %vm880, %v1487, %v1563
      %v1620 = vsel %vm881, %v1487, %v1563
      %v1621 = vsel %vm880, %v1492, %v1567
      %v1622 = vsel %vm881, %v1492, %v1567
      %v1623 = vsel %vm880, %v1497, %v1571
      %v1624 = vsel %vm881, %v1497, %v1571
      %v1625 = vsel %vm880, %v1502, %v1575
      %v1626 = vsel %vm881, %v1502, %v1575
      %v1627 = vsel %vm880, %v1507, %v1579
      %v1628 = vsel %vm881, %v1507, %v1579
      %v1629 = vsel %vm880, %v1512, %v1583
      %v1630 = vsel %vm881, %v1512, %v1583
      %v1631 = vsel %vm880, %v1517, %v1587
      %v1632 = vsel %vm881, %v1517, %v1587
      %v1633 = vsel %vm880, %v1522, %v1591
      %v1634 = vsel %vm881, %v1522, %v1591
      %v1635 = vsel %vm880, %v1527, %v1595
      %v1636 = vsel %vm881, %v1527, %v1595
      %v1637 = vsel %vm880, %v1532, %v1599
      %v1638 = vsel %vm881, %v1532, %v1599
      %v1639 = vsel %vm880, %v1537, %v1603
      %v1640 = vsel %vm881, %v1537, %v1603
      %v1641 = vsel %vm880, %v1542, %v1607
      %v1642 = vsel %vm881, %v1542, %v1607
      %v1643 = vsel %vm880, %v1547, %v1611
      %v1644 = vsel %vm881, %v1547, %v1611
      %1645 = vset.pattern.permute.xlu0 0
      %1646 = vperm.xlu0 %1645, %v1453
      %v1647 = vpop.permute.xlu0 %1646
      %1649 = vset.pattern.permute.xlu0 0
      %1650 = vperm.xlu0 %1649, %v1454
      %v1651 = vpop.permute.xlu0 %1650
      %1653 = vset.pattern.permute.xlu0 0
      %1654 = vperm.xlu0 %1653, %v1455
      %v1655 = vpop.permute.xlu0 %1654
      %1657 = vset.pattern.permute.xlu0 0
      %1658 = vperm.xlu0 %1657, %v1456
      %v1659 = vpop.permute.xlu0 %1658
      %1661 = vset.pattern.permute.xlu0 0
      %1662 = vperm.xlu0 %1661, %v1457
      %v1663 = vpop.permute.xlu0 %1662
      %1665 = vset.pattern.permute.xlu0 0
      %1666 = vperm.xlu0 %1665, %v1458
      %v1667 = vpop.permute.xlu0 %1666
      %1669 = vset.pattern.permute.xlu0 0
      %1670 = vperm.xlu0 %1669, %v1459
      %v1671 = vpop.permute.xlu0 %1670
      %1673 = vset.pattern.permute.xlu0 0
      %1674 = vperm.xlu0 %1673, %v1460
      %v1675 = vpop.permute.xlu0 %1674
      %1677 = vset.pattern.permute.xlu0 0
      %1678 = vperm.xlu0 %1677, %v1461
      %v1679 = vpop.permute.xlu0 %1678
      %1681 = vset.pattern.permute.xlu0 0
      %1682 = vperm.xlu0 %1681, %v1462
      %v1683 = vpop.permute.xlu0 %1682
      %1685 = vset.pattern.permute.xlu0 0
      %1686 = vperm.xlu0 %1685, %v1463
      %v1687 = vpop.permute.xlu0 %1686
      %1689 = vset.pattern.permute.xlu0 0
      %1690 = vperm.xlu0 %1689, %v1464
      %v1691 = vpop.permute.xlu0 %1690
      %1693 = vset.pattern.permute.xlu0 0
      %1694 = vperm.xlu0 %1693, %v1465
      %v1695 = vpop.permute.xlu0 %1694
      %1697 = vset.pattern.permute.xlu0 0
      %1698 = vperm.xlu0 %1697, %v1466
      %v1699 = vpop.permute.xlu0 %1698
      %1701 = vset.pattern.permute.xlu0 0
      %1702 = vperm.xlu0 %1701, %v1467
      %v1703 = vpop.permute.xlu0 %1702
      %1705 = vset.pattern.permute.xlu0 0
      %1706 = vperm.xlu0 %1705, %v1468
      %v1707 = vpop.permute.xlu0 %1706
      %v1709 = vsel %vm1067, %v1647, %v1613
      %v1710 = vsel %vm1068, %v1647, %v1614
      %v1711 = vsel %vm1067, %v1651, %v1615
      %v1712 = vsel %vm1068, %v1651, %v1616
      %v1713 = vsel %vm1067, %v1655, %v1617
      %v1714 = vsel %vm1068, %v1655, %v1618
      %v1715 = vsel %vm1067, %v1659, %v1619
      %v1716 = vsel %vm1068, %v1659, %v1620
      %v1717 = vsel %vm1067, %v1663, %v1621
      %v1718 = vsel %vm1068, %v1663, %v1622
      %v1719 = vsel %vm1067, %v1667, %v1623
      %v1720 = vsel %vm1068, %v1667, %v1624
      %v1721 = vsel %vm1067, %v1671, %v1625
      %v1722 = vsel %vm1068, %v1671, %v1626
      %v1723 = vsel %vm1067, %v1675, %v1627
      %v1724 = vsel %vm1068, %v1675, %v1628
      %v1725 = vsel %vm1067, %v1679, %v1629
      %v1726 = vsel %vm1068, %v1679, %v1630
      %v1727 = vsel %vm1067, %v1683, %v1631
      %v1728 = vsel %vm1068, %v1683, %v1632
      %v1729 = vsel %vm1067, %v1687, %v1633
      %v1730 = vsel %vm1068, %v1687, %v1634
      %v1731 = vsel %vm1067, %v1691, %v1635
      %v1732 = vsel %vm1068, %v1691, %v1636
      %v1733 = vsel %vm1067, %v1695, %v1637
      %v1734 = vsel %vm1068, %v1695, %v1638
      %v1735 = vsel %vm1067, %v1699, %v1639
      %v1736 = vsel %vm1068, %v1699, %v1640
      %v1737 = vsel %vm1067, %v1703, %v1641
      %v1738 = vsel %vm1068, %v1703, %v1642
      %v1739 = vsel %vm1067, %v1707, %v1643
      %v1740 = vsel %vm1068, %v1707, %v1644
      %v1741 = vld [vmem:[%s508] sm:$0xff]
      %v1742 = vld [vmem:[%s508 + $0x8] sm:$0xff]
      %v1743 = vld [vmem:[%s508 + $0x10] sm:$0xff]
      %v1744 = vld [vmem:[%s508 + $0x18] sm:$0xff]
      %v1745 = vld [vmem:[%s508 + $0x20] sm:$0xff]
      %v1746 = vld [vmem:[%s508 + $0x28] sm:$0xff]
      %v1747 = vld [vmem:[%s508 + $0x30] sm:$0xff]
      %v1748 = vld [vmem:[%s508 + $0x38] sm:$0xff]
      %v1749 = vld [vmem:[%s508 + $0x40] sm:$0xff]
      %v1750 = vld [vmem:[%s508 + $0x48] sm:$0xff]
      %v1751 = vld [vmem:[%s508 + $0x50] sm:$0xff]
      %v1752 = vld [vmem:[%s508 + $0x58] sm:$0xff]
      %v1753 = vld [vmem:[%s508 + $0x60] sm:$0xff]
      %v1754 = vld [vmem:[%s508 + $0x68] sm:$0xff]
      %v1755 = vld [vmem:[%s508 + $0x70] sm:$0xff]
      %v1756 = vld [vmem:[%s508 + $0x78] sm:$0xff]
      %1758 = vset.pattern.permute.xlu0 1
      %1759 = vperm.xlu0 %1758, %v1741
      %v1760 = vpop.permute.xlu0 %1759
      %1763 = vset.pattern.permute.xlu0 1
      %1764 = vperm.xlu0 %1763, %v1742
      %v1765 = vpop.permute.xlu0 %1764
      %1768 = vset.pattern.permute.xlu0 1
      %1769 = vperm.xlu0 %1768, %v1743
      %v1770 = vpop.permute.xlu0 %1769
      %1773 = vset.pattern.permute.xlu0 1
      %1774 = vperm.xlu0 %1773, %v1744
      %v1775 = vpop.permute.xlu0 %1774
      %1778 = vset.pattern.permute.xlu0 1
      %1779 = vperm.xlu0 %1778, %v1745
      %v1780 = vpop.permute.xlu0 %1779
      %1783 = vset.pattern.permute.xlu0 1
      %1784 = vperm.xlu0 %1783, %v1746
      %v1785 = vpop.permute.xlu0 %1784
      %1788 = vset.pattern.permute.xlu0 1
      %1789 = vperm.xlu0 %1788, %v1747
      %v1790 = vpop.permute.xlu0 %1789
      %1793 = vset.pattern.permute.xlu0 1
      %1794 = vperm.xlu0 %1793, %v1748
      %v1795 = vpop.permute.xlu0 %1794
      %1798 = vset.pattern.permute.xlu0 1
      %1799 = vperm.xlu0 %1798, %v1749
      %v1800 = vpop.permute.xlu0 %1799
      %1803 = vset.pattern.permute.xlu0 1
      %1804 = vperm.xlu0 %1803, %v1750
      %v1805 = vpop.permute.xlu0 %1804
      %1808 = vset.pattern.permute.xlu0 1
      %1809 = vperm.xlu0 %1808, %v1751
      %v1810 = vpop.permute.xlu0 %1809
      %1813 = vset.pattern.permute.xlu0 1
      %1814 = vperm.xlu0 %1813, %v1752
      %v1815 = vpop.permute.xlu0 %1814
      %1818 = vset.pattern.permute.xlu0 1
      %1819 = vperm.xlu0 %1818, %v1753
      %v1820 = vpop.permute.xlu0 %1819
      %1823 = vset.pattern.permute.xlu0 1
      %1824 = vperm.xlu0 %1823, %v1754
      %v1825 = vpop.permute.xlu0 %1824
      %1828 = vset.pattern.permute.xlu0 1
      %1829 = vperm.xlu0 %1828, %v1755
      %v1830 = vpop.permute.xlu0 %1829
      %1833 = vset.pattern.permute.xlu0 1
      %1834 = vperm.xlu0 %1833, %v1756
      %v1835 = vpop.permute.xlu0 %1834
      %1837 = vset.pattern.permute.xlu0 2
      %1838 = vperm.xlu0 %1837, %v1741
      %v1839 = vpop.permute.xlu0 %1838
      %1841 = vset.pattern.permute.xlu0 2
      %1842 = vperm.xlu0 %1841, %v1742
      %v1843 = vpop.permute.xlu0 %1842
      %1845 = vset.pattern.permute.xlu0 2
      %1846 = vperm.xlu0 %1845, %v1743
      %v1847 = vpop.permute.xlu0 %1846
      %1849 = vset.pattern.permute.xlu0 2
      %1850 = vperm.xlu0 %1849, %v1744
      %v1851 = vpop.permute.xlu0 %1850
      %1853 = vset.pattern.permute.xlu0 2
      %1854 = vperm.xlu0 %1853, %v1745
      %v1855 = vpop.permute.xlu0 %1854
      %1857 = vset.pattern.permute.xlu0 2
      %1858 = vperm.xlu0 %1857, %v1746
      %v1859 = vpop.permute.xlu0 %1858
      %1861 = vset.pattern.permute.xlu0 2
      %1862 = vperm.xlu0 %1861, %v1747
      %v1863 = vpop.permute.xlu0 %1862
      %1865 = vset.pattern.permute.xlu0 2
      %1866 = vperm.xlu0 %1865, %v1748
      %v1867 = vpop.permute.xlu0 %1866
      %1869 = vset.pattern.permute.xlu0 2
      %1870 = vperm.xlu0 %1869, %v1749
      %v1871 = vpop.permute.xlu0 %1870
      %1873 = vset.pattern.permute.xlu0 2
      %1874 = vperm.xlu0 %1873, %v1750
      %v1875 = vpop.permute.xlu0 %1874
      %1877 = vset.pattern.permute.xlu0 2
      %1878 = vperm.xlu0 %1877, %v1751
      %v1879 = vpop.permute.xlu0 %1878
      %1881 = vset.pattern.permute.xlu0 2
      %1882 = vperm.xlu0 %1881, %v1752
      %v1883 = vpop.permute.xlu0 %1882
      %1885 = vset.pattern.permute.xlu0 2
      %1886 = vperm.xlu0 %1885, %v1753
      %v1887 = vpop.permute.xlu0 %1886
      %1889 = vset.pattern.permute.xlu0 2
      %1890 = vperm.xlu0 %1889, %v1754
      %v1891 = vpop.permute.xlu0 %1890
      %1893 = vset.pattern.permute.xlu0 2
      %1894 = vperm.xlu0 %1893, %v1755
      %v1895 = vpop.permute.xlu0 %1894
      %1897 = vset.pattern.permute.xlu0 2
      %1898 = vperm.xlu0 %1897, %v1756
      %v1899 = vpop.permute.xlu0 %1898
      %v1901 = vsel %vm880, %v1760, %v1839
      %v1902 = vsel %vm881, %v1760, %v1839
      %v1903 = vsel %vm880, %v1765, %v1843
      %v1904 = vsel %vm881, %v1765, %v1843
      %v1905 = vsel %vm880, %v1770, %v1847
      %v1906 = vsel %vm881, %v1770, %v1847
      %v1907 = vsel %vm880, %v1775, %v1851
      %v1908 = vsel %vm881, %v1775, %v1851
      %v1909 = vsel %vm880, %v1780, %v1855
      %v1910 = vsel %vm881, %v1780, %v1855
      %v1911 = vsel %vm880, %v1785, %v1859
      %v1912 = vsel %vm881, %v1785, %v1859
      %v1913 = vsel %vm880, %v1790, %v1863
      %v1914 = vsel %vm881, %v1790, %v1863
      %v1915 = vsel %vm880, %v1795, %v1867
      %v1916 = vsel %vm881, %v1795, %v1867
      %v1917 = vsel %vm880, %v1800, %v1871
      %v1918 = vsel %vm881, %v1800, %v1871
      %v1919 = vsel %vm880, %v1805, %v1875
      %v1920 = vsel %vm881, %v1805, %v1875
      %v1921 = vsel %vm880, %v1810, %v1879
      %v1922 = vsel %vm881, %v1810, %v1879
      %v1923 = vsel %vm880, %v1815, %v1883
      %v1924 = vsel %vm881, %v1815, %v1883
      %v1925 = vsel %vm880, %v1820, %v1887
      %v1926 = vsel %vm881, %v1820, %v1887
      %v1927 = vsel %vm880, %v1825, %v1891
      %v1928 = vsel %vm881, %v1825, %v1891
      %v1929 = vsel %vm880, %v1830, %v1895
      %v1930 = vsel %vm881, %v1830, %v1895
      %v1931 = vsel %vm880, %v1835, %v1899
      %v1932 = vsel %vm881, %v1835, %v1899
      %1933 = vset.pattern.permute.xlu0 0
      %1934 = vperm.xlu0 %1933, %v1741
      %v1935 = vpop.permute.xlu0 %1934
      %1937 = vset.pattern.permute.xlu0 0
      %1938 = vperm.xlu0 %1937, %v1742
      %v1939 = vpop.permute.xlu0 %1938
      %1941 = vset.pattern.permute.xlu0 0
      %1942 = vperm.xlu0 %1941, %v1743
      %v1943 = vpop.permute.xlu0 %1942
      %1945 = vset.pattern.permute.xlu0 0
      %1946 = vperm.xlu0 %1945, %v1744
      %v1947 = vpop.permute.xlu0 %1946
      %1949 = vset.pattern.permute.xlu0 0
      %1950 = vperm.xlu0 %1949, %v1745
      %v1951 = vpop.permute.xlu0 %1950
      %1953 = vset.pattern.permute.xlu0 0
      %1954 = vperm.xlu0 %1953, %v1746
      %v1955 = vpop.permute.xlu0 %1954
      %1957 = vset.pattern.permute.xlu0 0
      %1958 = vperm.xlu0 %1957, %v1747
      %v1959 = vpop.permute.xlu0 %1958
      %1961 = vset.pattern.permute.xlu0 0
      %1962 = vperm.xlu0 %1961, %v1748
      %v1963 = vpop.permute.xlu0 %1962
      %1965 = vset.pattern.permute.xlu0 0
      %1966 = vperm.xlu0 %1965, %v1749
      %v1967 = vpop.permute.xlu0 %1966
      %1969 = vset.pattern.permute.xlu0 0
      %1970 = vperm.xlu0 %1969, %v1750
      %v1971 = vpop.permute.xlu0 %1970
      %1973 = vset.pattern.permute.xlu0 0
      %1974 = vperm.xlu0 %1973, %v1751
      %v1975 = vpop.permute.xlu0 %1974
      %1977 = vset.pattern.permute.xlu0 0
      %1978 = vperm.xlu0 %1977, %v1752
      %v1979 = vpop.permute.xlu0 %1978
      %1981 = vset.pattern.permute.xlu0 0
      %1982 = vperm.xlu0 %1981, %v1753
      %v1983 = vpop.permute.xlu0 %1982
      %1985 = vset.pattern.permute.xlu0 0
      %1986 = vperm.xlu0 %1985, %v1754
      %v1987 = vpop.permute.xlu0 %1986
      %1989 = vset.pattern.permute.xlu0 0
      %1990 = vperm.xlu0 %1989, %v1755
      %v1991 = vpop.permute.xlu0 %1990
      %1993 = vset.pattern.permute.xlu0 0
      %1994 = vperm.xlu0 %1993, %v1756
      %v1995 = vpop.permute.xlu0 %1994
      %v1997 = vsel %vm1067, %v1935, %v1901
      %v1998 = vsel %vm1068, %v1935, %v1902
      %v1999 = vsel %vm1067, %v1939, %v1903
      %v2000 = vsel %vm1068, %v1939, %v1904
      %v2001 = vsel %vm1067, %v1943, %v1905
      %v2002 = vsel %vm1068, %v1943, %v1906
      %v2003 = vsel %vm1067, %v1947, %v1907
      %v2004 = vsel %vm1068, %v1947, %v1908
      %v2005 = vsel %vm1067, %v1951, %v1909
      %v2006 = vsel %vm1068, %v1951, %v1910
      %v2007 = vsel %vm1067, %v1955, %v1911
      %v2008 = vsel %vm1068, %v1955, %v1912
      %v2009 = vsel %vm1067, %v1959, %v1913
      %v2010 = vsel %vm1068, %v1959, %v1914
      %v2011 = vsel %vm1067, %v1963, %v1915
      %v2012 = vsel %vm1068, %v1963, %v1916
      %v2013 = vsel %vm1067, %v1967, %v1917
      %v2014 = vsel %vm1068, %v1967, %v1918
      %v2015 = vsel %vm1067, %v1971, %v1919
      %v2016 = vsel %vm1068, %v1971, %v1920
      %v2017 = vsel %vm1067, %v1975, %v1921
      %v2018 = vsel %vm1068, %v1975, %v1922
      %v2019 = vsel %vm1067, %v1979, %v1923
      %v2020 = vsel %vm1068, %v1979, %v1924
      %v2021 = vsel %vm1067, %v1983, %v1925
      %v2022 = vsel %vm1068, %v1983, %v1926
      %v2023 = vsel %vm1067, %v1987, %v1927
      %v2024 = vsel %vm1068, %v1987, %v1928
      %v2025 = vsel %vm1067, %v1991, %v1929
      %v2026 = vsel %vm1068, %v1991, %v1930
      %v2027 = vsel %vm1067, %v1995, %v1931
      %v2028 = vsel %vm1068, %v1995, %v1932
      %v2029 = vsel %vm821, %v577, 1.0
      %v2030 = vsel %vm822, %v578, 1.0
      %v2031 = vsel %vm823, %v579, 1.0
      %v2032 = vsel %vm824, %v580, 1.0
      %v2033 = vsel %vm825, %v581, 1.0
      %v2034 = vsel %vm826, %v582, 1.0
      %v2035 = vsel %vm827, %v583, 1.0
      %v2036 = vsel %vm828, %v584, 1.0
      %v2037 = vsel %vm829, %v585, 1.0
      %v2038 = vsel %vm830, %v586, 1.0
      %v2039 = vsel %vm831, %v587, 1.0
      %v2040 = vsel %vm832, %v588, 1.0
      %v2041 = vsel %vm833, %v589, 1.0
      %v2042 = vsel %vm834, %v590, 1.0
      %v2043 = vsel %vm835, %v591, 1.0
      %v2044 = vsel %vm836, %v592, 1.0
      %v2045 = vsel %vm837, %v593, 1.0
      %v2046 = vsel %vm838, %v594, 1.0
      %v2047 = vsel %vm839, %v595, 1.0
      %v2048 = vsel %vm840, %v596, 1.0
      %v2049 = vsel %vm841, %v597, 1.0
      %v2050 = vsel %vm842, %v598, 1.0
      %v2051 = vsel %vm843, %v599, 1.0
      %v2052 = vsel %vm844, %v600, 1.0
      %v2053 = vsel %vm845, %v601, 1.0
      %v2054 = vsel %vm846, %v602, 1.0
      %v2055 = vsel %vm847, %v603, 1.0
      %v2056 = vsel %vm848, %v604, 1.0
      %v2057 = vsel %vm849, %v605, 1.0
      %v2058 = vsel %vm850, %v606, 1.0
      %v2059 = vsel %vm851, %v607, 1.0
      %v2060 = vsel %vm852, %v608, 1.0
      %v2061 = vmul.f32 %v2029, %v2029
      %v2062 = vmul.f32 %v2030, %v2030
      %v2063 = vmul.f32 %v2031, %v2031
      %v2064 = vmul.f32 %v2032, %v2032
      %v2065 = vmul.f32 %v2033, %v2033
      %v2066 = vmul.f32 %v2034, %v2034
      %v2067 = vmul.f32 %v2035, %v2035
      %v2068 = vmul.f32 %v2036, %v2036
      %v2069 = vmul.f32 %v2037, %v2037
      %v2070 = vmul.f32 %v2038, %v2038
      %v2071 = vmul.f32 %v2039, %v2039
      %v2072 = vmul.f32 %v2040, %v2040
      %v2073 = vmul.f32 %v2041, %v2041
      %v2074 = vmul.f32 %v2042, %v2042
      %v2075 = vmul.f32 %v2043, %v2043
      %v2076 = vmul.f32 %v2044, %v2044
      %v2077 = vmul.f32 %v2045, %v2045
      %v2078 = vmul.f32 %v2046, %v2046
      %v2079 = vmul.f32 %v2047, %v2047
      %v2080 = vmul.f32 %v2048, %v2048
      %v2081 = vmul.f32 %v2049, %v2049
      %v2082 = vmul.f32 %v2050, %v2050
      %v2083 = vmul.f32 %v2051, %v2051
      %v2084 = vmul.f32 %v2052, %v2052
      %v2085 = vmul.f32 %v2053, %v2053
      %v2086 = vmul.f32 %v2054, %v2054
      %v2087 = vmul.f32 %v2055, %v2055
      %v2088 = vmul.f32 %v2056, %v2056
      %v2089 = vmul.f32 %v2057, %v2057
      %v2090 = vmul.f32 %v2058, %v2058
      %v2091 = vmul.f32 %v2059, %v2059
      %v2092 = vmul.f32 %v2060, %v2060
      %v2093 = vrcp.pop %v2061
      %v2094 = vrcp.pop %v2062
      %v2095 = vrcp.pop %v2063
      %v2096 = vrcp.pop %v2064
      %v2097 = vrcp.pop %v2065
      %v2098 = vrcp.pop %v2066
      %v2099 = vrcp.pop %v2067
      %v2100 = vrcp.pop %v2068
      %v2101 = vrcp.pop %v2069
      %v2102 = vrcp.pop %v2070
      %v2103 = vrcp.pop %v2071
      %v2104 = vrcp.pop %v2072
      %v2105 = vrcp.pop %v2073
      %v2106 = vrcp.pop %v2074
      %v2107 = vrcp.pop %v2075
      %v2108 = vrcp.pop %v2076
      %v2109 = vrcp.pop %v2077
      %v2110 = vrcp.pop %v2078
      %v2111 = vrcp.pop %v2079
      %v2112 = vrcp.pop %v2080
      %v2113 = vrcp.pop %v2081
      %v2114 = vrcp.pop %v2082
      %v2115 = vrcp.pop %v2083
      %v2116 = vrcp.pop %v2084
      %v2117 = vrcp.pop %v2085
      %v2118 = vrcp.pop %v2086
      %v2119 = vrcp.pop %v2087
      %v2120 = vrcp.pop %v2088
      %v2121 = vrcp.pop %v2089
      %v2122 = vrcp.pop %v2090
      %v2123 = vrcp.pop %v2091
      %v2124 = vrcp.pop %v2092
      %v2125 = vmul.f32 %v2061, %v2093
      %v2126 = vmul.f32 %v2062, %v2094
      %v2127 = vmul.f32 %v2063, %v2095
      %v2128 = vmul.f32 %v2064, %v2096
      %v2129 = vmul.f32 %v2065, %v2097
      %v2130 = vmul.f32 %v2066, %v2098
      %v2131 = vmul.f32 %v2067, %v2099
      %v2132 = vmul.f32 %v2068, %v2100
      %v2133 = vmul.f32 %v2069, %v2101
      %v2134 = vmul.f32 %v2070, %v2102
      %v2135 = vmul.f32 %v2071, %v2103
      %v2136 = vmul.f32 %v2072, %v2104
      %v2137 = vmul.f32 %v2073, %v2105
      %v2138 = vmul.f32 %v2074, %v2106
      %v2139 = vmul.f32 %v2075, %v2107
      %v2140 = vmul.f32 %v2076, %v2108
      %v2141 = vmul.f32 %v2077, %v2109
      %v2142 = vmul.f32 %v2078, %v2110
      %v2143 = vmul.f32 %v2079, %v2111
      %v2144 = vmul.f32 %v2080, %v2112
      %v2145 = vmul.f32 %v2081, %v2113
      %v2146 = vmul.f32 %v2082, %v2114
      %v2147 = vmul.f32 %v2083, %v2115
      %v2148 = vmul.f32 %v2084, %v2116
      %v2149 = vmul.f32 %v2085, %v2117
      %v2150 = vmul.f32 %v2086, %v2118
      %v2151 = vmul.f32 %v2087, %v2119
      %v2152 = vmul.f32 %v2088, %v2120
      %v2153 = vmul.f32 %v2089, %v2121
      %v2154 = vmul.f32 %v2090, %v2122
      %v2155 = vmul.f32 %v2091, %v2123
      %v2156 = vmul.f32 %v2092, %v2124
      %v2157 = vsub.f32 2.0, %v2125
      %v2158 = vsub.f32 2.0, %v2126
      %v2159 = vsub.f32 2.0, %v2127
      %v2160 = vsub.f32 2.0, %v2128
      %v2161 = vsub.f32 2.0, %v2129
      %v2162 = vsub.f32 2.0, %v2130
      %v2163 = vsub.f32 2.0, %v2131
      %v2164 = vsub.f32 2.0, %v2132
      %v2165 = vsub.f32 2.0, %v2133
      %v2166 = vsub.f32 2.0, %v2134
      %v2167 = vsub.f32 2.0, %v2135
      %v2168 = vsub.f32 2.0, %v2136
      %v2169 = vsub.f32 2.0, %v2137
      %v2170 = vsub.f32 2.0, %v2138
      %v2171 = vsub.f32 2.0, %v2139
      %v2172 = vsub.f32 2.0, %v2140
      %v2173 = vsub.f32 2.0, %v2141
      %v2174 = vsub.f32 2.0, %v2142
      %v2175 = vsub.f32 2.0, %v2143
      %v2176 = vsub.f32 2.0, %v2144
      %v2177 = vsub.f32 2.0, %v2145
      %v2178 = vsub.f32 2.0, %v2146
      %v2179 = vsub.f32 2.0, %v2147
      %v2180 = vsub.f32 2.0, %v2148
      %v2181 = vsub.f32 2.0, %v2149
      %v2182 = vsub.f32 2.0, %v2150
      %v2183 = vsub.f32 2.0, %v2151
      %v2184 = vsub.f32 2.0, %v2152
      %v2185 = vsub.f32 2.0, %v2153
      %v2186 = vsub.f32 2.0, %v2154
      %v2187 = vsub.f32 2.0, %v2155
      %v2188 = vsub.f32 2.0, %v2156
      %v2189 = vmul.f32 %v2093, %v2157
      %v2190 = vmul.f32 %v2094, %v2158
      %v2191 = vmul.f32 %v2095, %v2159
      %v2192 = vmul.f32 %v2096, %v2160
      %v2193 = vmul.f32 %v2097, %v2161
      %v2194 = vmul.f32 %v2098, %v2162
      %v2195 = vmul.f32 %v2099, %v2163
      %v2196 = vmul.f32 %v2100, %v2164
      %v2197 = vmul.f32 %v2101, %v2165
      %v2198 = vmul.f32 %v2102, %v2166
      %v2199 = vmul.f32 %v2103, %v2167
      %v2200 = vmul.f32 %v2104, %v2168
      %v2201 = vmul.f32 %v2105, %v2169
      %v2202 = vmul.f32 %v2106, %v2170
      %v2203 = vmul.f32 %v2107, %v2171
      %v2204 = vmul.f32 %v2108, %v2172
      %v2205 = vmul.f32 %v2109, %v2173
      %v2206 = vmul.f32 %v2110, %v2174
      %v2207 = vmul.f32 %v2111, %v2175
      %v2208 = vmul.f32 %v2112, %v2176
      %v2209 = vmul.f32 %v2113, %v2177
      %v2210 = vmul.f32 %v2114, %v2178
      %v2211 = vmul.f32 %v2115, %v2179
      %v2212 = vmul.f32 %v2116, %v2180
      %v2213 = vmul.f32 %v2117, %v2181
      %v2214 = vmul.f32 %v2118, %v2182
      %v2215 = vmul.f32 %v2119, %v2183
      %v2216 = vmul.f32 %v2120, %v2184
      %v2217 = vmul.f32 %v2121, %v2185
      %v2218 = vmul.f32 %v2122, %v2186
      %v2219 = vmul.f32 %v2123, %v2187
      %v2220 = vmul.f32 %v2124, %v2188
      %v2221 = vmul.f32 %v2189, %v2189
      %v2222 = vmul.f32 %v2190, %v2190
      %v2223 = vmul.f32 %v2191, %v2191
      %v2224 = vmul.f32 %v2192, %v2192
      %v2225 = vmul.f32 %v2193, %v2193
      %v2226 = vmul.f32 %v2194, %v2194
      %v2227 = vmul.f32 %v2195, %v2195
      %v2228 = vmul.f32 %v2196, %v2196
      %v2229 = vmul.f32 %v2197, %v2197
      %v2230 = vmul.f32 %v2198, %v2198
      %v2231 = vmul.f32 %v2199, %v2199
      %v2232 = vmul.f32 %v2200, %v2200
      %v2233 = vmul.f32 %v2201, %v2201
      %v2234 = vmul.f32 %v2202, %v2202
      %v2235 = vmul.f32 %v2203, %v2203
      %v2236 = vmul.f32 %v2204, %v2204
      %v2237 = vmul.f32 %v2205, %v2205
      %v2238 = vmul.f32 %v2206, %v2206
      %v2239 = vmul.f32 %v2207, %v2207
      %v2240 = vmul.f32 %v2208, %v2208
      %v2241 = vmul.f32 %v2209, %v2209
      %v2242 = vmul.f32 %v2210, %v2210
      %v2243 = vmul.f32 %v2211, %v2211
      %v2244 = vmul.f32 %v2212, %v2212
      %v2245 = vmul.f32 %v2213, %v2213
      %v2246 = vmul.f32 %v2214, %v2214
      %v2247 = vmul.f32 %v2215, %v2215
      %v2248 = vmul.f32 %v2216, %v2216
      %v2249 = vmul.f32 %v2217, %v2217
      %v2250 = vmul.f32 %v2218, %v2218
      %v2251 = vmul.f32 %v2219, %v2219
      %v2252 = vmul.f32 %v2220, %v2220
      %v2253 = vmul.f32 %v2221, %v2189
      %v2254 = vmul.f32 %v2222, %v2190
      %v2255 = vmul.f32 %v2223, %v2191
      %v2256 = vmul.f32 %v2224, %v2192
      %v2257 = vmul.f32 %v2225, %v2193
      %v2258 = vmul.f32 %v2226, %v2194
      %v2259 = vmul.f32 %v2227, %v2195
      %v2260 = vmul.f32 %v2228, %v2196
      %v2261 = vmul.f32 %v2229, %v2197
      %v2262 = vmul.f32 %v2230, %v2198
      %v2263 = vmul.f32 %v2231, %v2199
      %v2264 = vmul.f32 %v2232, %v2200
      %v2265 = vmul.f32 %v2233, %v2201
      %v2266 = vmul.f32 %v2234, %v2202
      %v2267 = vmul.f32 %v2235, %v2203
      %v2268 = vmul.f32 %v2236, %v2204
      %v2269 = vmul.f32 %v2237, %v2205
      %v2270 = vmul.f32 %v2238, %v2206
      %v2271 = vmul.f32 %v2239, %v2207
      %v2272 = vmul.f32 %v2240, %v2208
      %v2273 = vmul.f32 %v2241, %v2209
      %v2274 = vmul.f32 %v2242, %v2210
      %v2275 = vmul.f32 %v2243, %v2211
      %v2276 = vmul.f32 %v2244, %v2212
      %v2277 = vmul.f32 %v2245, %v2213
      %v2278 = vmul.f32 %v2246, %v2214
      %v2279 = vmul.f32 %v2247, %v2215
      %v2280 = vmul.f32 %v2248, %v2216
      %v2281 = vmul.f32 %v2249, %v2217
      %v2282 = vmul.f32 %v2250, %v2218
      %v2283 = vmul.f32 %v2251, %v2219
      %v2284 = vmul.f32 %v2252, %v2220
      %v2285 = vmul.f32 %v2253, %v2189
      %v2286 = vmul.f32 %v2254, %v2190
      %v2287 = vmul.f32 %v2255, %v2191
      %v2288 = vmul.f32 %v2256, %v2192
      %v2289 = vmul.f32 %v2257, %v2193
      %v2290 = vmul.f32 %v2258, %v2194
      %v2291 = vmul.f32 %v2259, %v2195
      %v2292 = vmul.f32 %v2260, %v2196
      %v2293 = vmul.f32 %v2261, %v2197
      %v2294 = vmul.f32 %v2262, %v2198
      %v2295 = vmul.f32 %v2263, %v2199
      %v2296 = vmul.f32 %v2264, %v2200
      %v2297 = vmul.f32 %v2265, %v2201
      %v2298 = vmul.f32 %v2266, %v2202
      %v2299 = vmul.f32 %v2267, %v2203
      %v2300 = vmul.f32 %v2268, %v2204
      %v2301 = vmul.f32 %v2269, %v2205
      %v2302 = vmul.f32 %v2270, %v2206
      %v2303 = vmul.f32 %v2271, %v2207
      %v2304 = vmul.f32 %v2272, %v2208
      %v2305 = vmul.f32 %v2273, %v2209
      %v2306 = vmul.f32 %v2274, %v2210
      %v2307 = vmul.f32 %v2275, %v2211
      %v2308 = vmul.f32 %v2276, %v2212
      %v2309 = vmul.f32 %v2277, %v2213
      %v2310 = vmul.f32 %v2278, %v2214
      %v2311 = vmul.f32 %v2279, %v2215
      %v2312 = vmul.f32 %v2280, %v2216
      %v2313 = vmul.f32 %v2281, %v2217
      %v2314 = vmul.f32 %v2282, %v2218
      %v2315 = vmul.f32 %v2283, %v2219
      %v2316 = vmul.f32 %v2284, %v2220
      %v2317 = vmul.f32 %v1421, %v2029
      %v2318 = vmul.f32 %v1422, %v2030
      %v2319 = vmul.f32 %v1423, %v2031
      %v2320 = vmul.f32 %v1424, %v2032
      %v2321 = vmul.f32 %v1425, %v2033
      %v2322 = vmul.f32 %v1426, %v2034
      %v2323 = vmul.f32 %v1427, %v2035
      %v2324 = vmul.f32 %v1428, %v2036
      %v2325 = vmul.f32 %v1429, %v2037
      %v2326 = vmul.f32 %v1430, %v2038
      %v2327 = vmul.f32 %v1431, %v2039
      %v2328 = vmul.f32 %v1432, %v2040
      %v2329 = vmul.f32 %v1433, %v2041
      %v2330 = vmul.f32 %v1434, %v2042
      %v2331 = vmul.f32 %v1435, %v2043
      %v2332 = vmul.f32 %v1436, %v2044
      %v2333 = vmul.f32 %v1437, %v2045
      %v2334 = vmul.f32 %v1438, %v2046
      %v2335 = vmul.f32 %v1439, %v2047
      %v2336 = vmul.f32 %v1440, %v2048
      %v2337 = vmul.f32 %v1441, %v2049
      %v2338 = vmul.f32 %v1442, %v2050
      %v2339 = vmul.f32 %v1443, %v2051
      %v2340 = vmul.f32 %v1444, %v2052
      %v2341 = vmul.f32 %v1445, %v2053
      %v2342 = vmul.f32 %v1446, %v2054
      %v2343 = vmul.f32 %v1447, %v2055
      %v2344 = vmul.f32 %v1448, %v2056
      %v2345 = vmul.f32 %v1449, %v2057
      %v2346 = vmul.f32 %v1450, %v2058
      %v2347 = vmul.f32 %v1451, %v2059
      %v2348 = vmul.f32 %v1452, %v2060
      %v2349 = vmul.f32 %v2317, 1.442695
      %v2350 = vpow.pop %v2349
      %v2351 = vmul.f32 %v2318, 1.442695
      %v2352 = vpow.pop %v2351
      %v2353 = vmul.f32 %v2319, 1.442695
      %v2354 = vpow.pop %v2353
      %v2355 = vmul.f32 %v2320, 1.442695
      %v2356 = vpow.pop %v2355
      %v2357 = vmul.f32 %v2321, 1.442695
      %v2358 = vpow.pop %v2357
      %v2359 = vmul.f32 %v2322, 1.442695
      %v2360 = vpow.pop %v2359
      %v2361 = vmul.f32 %v2323, 1.442695
      %v2362 = vpow.pop %v2361
      %v2363 = vmul.f32 %v2324, 1.442695
      %v2364 = vpow.pop %v2363
      %v2365 = vmul.f32 %v2325, 1.442695
      %v2366 = vpow.pop %v2365
      %v2367 = vmul.f32 %v2326, 1.442695
      %v2368 = vpow.pop %v2367
      %v2369 = vmul.f32 %v2327, 1.442695
      %v2370 = vpow.pop %v2369
      %v2371 = vmul.f32 %v2328, 1.442695
      %v2372 = vpow.pop %v2371
      %v2373 = vmul.f32 %v2329, 1.442695
      %v2374 = vpow.pop %v2373
      %v2375 = vmul.f32 %v2330, 1.442695
      %v2376 = vpow.pop %v2375
      %v2377 = vmul.f32 %v2331, 1.442695
      %v2378 = vpow.pop %v2377
      %v2379 = vmul.f32 %v2332, 1.442695
      %v2380 = vpow.pop %v2379
      %v2381 = vmul.f32 %v2333, 1.442695
      %v2382 = vpow.pop %v2381
      %v2383 = vmul.f32 %v2334, 1.442695
      %v2384 = vpow.pop %v2383
      %v2385 = vmul.f32 %v2335, 1.442695
      %v2386 = vpow.pop %v2385
      %v2387 = vmul.f32 %v2336, 1.442695
      %v2388 = vpow.pop %v2387
      %v2389 = vmul.f32 %v2337, 1.442695
      %v2390 = vpow.pop %v2389
      %v2391 = vmul.f32 %v2338, 1.442695
      %v2392 = vpow.pop %v2391
      %v2393 = vmul.f32 %v2339, 1.442695
      %v2394 = vpow.pop %v2393
      %v2395 = vmul.f32 %v2340, 1.442695
      %v2396 = vpow.pop %v2395
      %v2397 = vmul.f32 %v2341, 1.442695
      %v2398 = vpow.pop %v2397
      %v2399 = vmul.f32 %v2342, 1.442695
      %v2400 = vpow.pop %v2399
      %v2401 = vmul.f32 %v2343, 1.442695
      %v2402 = vpow.pop %v2401
      %v2403 = vmul.f32 %v2344, 1.442695
      %v2404 = vpow.pop %v2403
      %v2405 = vmul.f32 %v2345, 1.442695
      %v2406 = vpow.pop %v2405
      %v2407 = vmul.f32 %v2346, 1.442695
      %v2408 = vpow.pop %v2407
      %v2409 = vmul.f32 %v2347, 1.442695
      %v2410 = vpow.pop %v2409
      %v2411 = vmul.f32 %v2348, 1.442695
      %v2412 = vpow.pop %v2411
      %v2413 = vmul.f32 %v1133, %v2350
      %v2414 = vmul.f32 %v1134, %v2352
      %v2415 = vmul.f32 %v1135, %v2354
      %v2416 = vmul.f32 %v1136, %v2356
      %v2417 = vmul.f32 %v1137, %v2358
      %v2418 = vmul.f32 %v1138, %v2360
      %v2419 = vmul.f32 %v1139, %v2362
      %v2420 = vmul.f32 %v1140, %v2364
      %v2421 = vmul.f32 %v1141, %v2366
      %v2422 = vmul.f32 %v1142, %v2368
      %v2423 = vmul.f32 %v1143, %v2370
      %v2424 = vmul.f32 %v1144, %v2372
      %v2425 = vmul.f32 %v1145, %v2374
      %v2426 = vmul.f32 %v1146, %v2376
      %v2427 = vmul.f32 %v1147, %v2378
      %v2428 = vmul.f32 %v1148, %v2380
      %v2429 = vmul.f32 %v1149, %v2382
      %v2430 = vmul.f32 %v1150, %v2384
      %v2431 = vmul.f32 %v1151, %v2386
      %v2432 = vmul.f32 %v1152, %v2388
      %v2433 = vmul.f32 %v1153, %v2390
      %v2434 = vmul.f32 %v1154, %v2392
      %v2435 = vmul.f32 %v1155, %v2394
      %v2436 = vmul.f32 %v1156, %v2396
      %v2437 = vmul.f32 %v1157, %v2398
      %v2438 = vmul.f32 %v1158, %v2400
      %v2439 = vmul.f32 %v1159, %v2402
      %v2440 = vmul.f32 %v1160, %v2404
      %v2441 = vmul.f32 %v1161, %v2406
      %v2442 = vmul.f32 %v1162, %v2408
      %v2443 = vmul.f32 %v1163, %v2410
      %v2444 = vmul.f32 %v1164, %v2412
      %v2445 = vmul.f32 %v1709, %v2253
      %v2446 = vmul.f32 %v1710, %v2254
      %v2447 = vmul.f32 %v1711, %v2255
      %v2448 = vmul.f32 %v1712, %v2256
      %v2449 = vmul.f32 %v1713, %v2257
      %v2450 = vmul.f32 %v1714, %v2258
      %v2451 = vmul.f32 %v1715, %v2259
      %v2452 = vmul.f32 %v1716, %v2260
      %v2453 = vmul.f32 %v1717, %v2261
      %v2454 = vmul.f32 %v1718, %v2262
      %v2455 = vmul.f32 %v1719, %v2263
      %v2456 = vmul.f32 %v1720, %v2264
      %v2457 = vmul.f32 %v1721, %v2265
      %v2458 = vmul.f32 %v1722, %v2266
      %v2459 = vmul.f32 %v1723, %v2267
      %v2460 = vmul.f32 %v1724, %v2268
      %v2461 = vmul.f32 %v1725, %v2269
      %v2462 = vmul.f32 %v1726, %v2270
      %v2463 = vmul.f32 %v1727, %v2271
      %v2464 = vmul.f32 %v1728, %v2272
      %v2465 = vmul.f32 %v1729, %v2273
      %v2466 = vmul.f32 %v1730, %v2274
      %v2467 = vmul.f32 %v1731, %v2275
      %v2468 = vmul.f32 %v1732, %v2276
      %v2469 = vmul.f32 %v1733, %v2277
      %v2470 = vmul.f32 %v1734, %v2278
      %v2471 = vmul.f32 %v1735, %v2279
      %v2472 = vmul.f32 %v1736, %v2280
      %v2473 = vmul.f32 %v1737, %v2281
      %v2474 = vmul.f32 %v1738, %v2282
      %v2475 = vmul.f32 %v1739, %v2283
      %v2476 = vmul.f32 %v1740, %v2284
      %v2477 = vsub.f32 %v2413, %v2445
      %v2478 = vsub.f32 %v2414, %v2446
      %v2479 = vsub.f32 %v2415, %v2447
      %v2480 = vsub.f32 %v2416, %v2448
      %v2481 = vsub.f32 %v2417, %v2449
      %v2482 = vsub.f32 %v2418, %v2450
      %v2483 = vsub.f32 %v2419, %v2451
      %v2484 = vsub.f32 %v2420, %v2452
      %v2485 = vsub.f32 %v2421, %v2453
      %v2486 = vsub.f32 %v2422, %v2454
      %v2487 = vsub.f32 %v2423, %v2455
      %v2488 = vsub.f32 %v2424, %v2456
      %v2489 = vsub.f32 %v2425, %v2457
      %v2490 = vsub.f32 %v2426, %v2458
      %v2491 = vsub.f32 %v2427, %v2459
      %v2492 = vsub.f32 %v2428, %v2460
      %v2493 = vsub.f32 %v2429, %v2461
      %v2494 = vsub.f32 %v2430, %v2462
      %v2495 = vsub.f32 %v2431, %v2463
      %v2496 = vsub.f32 %v2432, %v2464
      %v2497 = vsub.f32 %v2433, %v2465
      %v2498 = vsub.f32 %v2434, %v2466
      %v2499 = vsub.f32 %v2435, %v2467
      %v2500 = vsub.f32 %v2436, %v2468
      %v2501 = vsub.f32 %v2437, %v2469
      %v2502 = vsub.f32 %v2438, %v2470
      %v2503 = vsub.f32 %v2439, %v2471
      %v2504 = vsub.f32 %v2440, %v2472
      %v2505 = vsub.f32 %v2441, %v2473
      %v2506 = vsub.f32 %v2442, %v2474
      %v2507 = vsub.f32 %v2443, %v2475
      %v2508 = vsub.f32 %v2444, %v2476
      %v2509 = vmul.f32 %v1997, %v2285
      %v2510 = vmul.f32 %v1998, %v2286
      %v2511 = vmul.f32 %v1999, %v2287
      %v2512 = vmul.f32 %v2000, %v2288
      %v2513 = vmul.f32 %v2001, %v2289
      %v2514 = vmul.f32 %v2002, %v2290
      %v2515 = vmul.f32 %v2003, %v2291
      %v2516 = vmul.f32 %v2004, %v2292
      %v2517 = vmul.f32 %v2005, %v2293
      %v2518 = vmul.f32 %v2006, %v2294
      %v2519 = vmul.f32 %v2007, %v2295
      %v2520 = vmul.f32 %v2008, %v2296
      %v2521 = vmul.f32 %v2009, %v2297
      %v2522 = vmul.f32 %v2010, %v2298
      %v2523 = vmul.f32 %v2011, %v2299
      %v2524 = vmul.f32 %v2012, %v2300
      %v2525 = vmul.f32 %v2013, %v2301
      %v2526 = vmul.f32 %v2014, %v2302
      %v2527 = vmul.f32 %v2015, %v2303
      %v2528 = vmul.f32 %v2016, %v2304
      %v2529 = vmul.f32 %v2017, %v2305
      %v2530 = vmul.f32 %v2018, %v2306
      %v2531 = vmul.f32 %v2019, %v2307
      %v2532 = vmul.f32 %v2020, %v2308
      %v2533 = vmul.f32 %v2021, %v2309
      %v2534 = vmul.f32 %v2022, %v2310
      %v2535 = vmul.f32 %v2023, %v2311
      %v2536 = vmul.f32 %v2024, %v2312
      %v2537 = vmul.f32 %v2025, %v2313
      %v2538 = vmul.f32 %v2026, %v2314
      %v2539 = vmul.f32 %v2027, %v2315
      %v2540 = vmul.f32 %v2028, %v2316
      %v2541 = vsub.f32 %v2477, %v2509
      %v2542 = vsub.f32 %v2478, %v2510
      %v2543 = vsub.f32 %v2479, %v2511
      %v2544 = vsub.f32 %v2480, %v2512
      %v2545 = vsub.f32 %v2481, %v2513
      %v2546 = vsub.f32 %v2482, %v2514
      %v2547 = vsub.f32 %v2483, %v2515
      %v2548 = vsub.f32 %v2484, %v2516
      %v2549 = vsub.f32 %v2485, %v2517
      %v2550 = vsub.f32 %v2486, %v2518
      %v2551 = vsub.f32 %v2487, %v2519
      %v2552 = vsub.f32 %v2488, %v2520
      %v2553 = vsub.f32 %v2489, %v2521
      %v2554 = vsub.f32 %v2490, %v2522
      %v2555 = vsub.f32 %v2491, %v2523
      %v2556 = vsub.f32 %v2492, %v2524
      %v2557 = vsub.f32 %v2493, %v2525
      %v2558 = vsub.f32 %v2494, %v2526
      %v2559 = vsub.f32 %v2495, %v2527
      %v2560 = vsub.f32 %v2496, %v2528
      %v2561 = vsub.f32 %v2497, %v2529
      %v2562 = vsub.f32 %v2498, %v2530
      %v2563 = vsub.f32 %v2499, %v2531
      %v2564 = vsub.f32 %v2500, %v2532
      %v2565 = vsub.f32 %v2501, %v2533
      %v2566 = vsub.f32 %v2502, %v2534
      %v2567 = vsub.f32 %v2503, %v2535
      %v2568 = vsub.f32 %v2504, %v2536
      %v2569 = vsub.f32 %v2505, %v2537
      %v2570 = vsub.f32 %v2506, %v2538
      %v2571 = vsub.f32 %v2507, %v2539
      %v2572 = vsub.f32 %v2508, %v2540
      %v2573 = vmul.f32 %v2541, %v609
      %v2574 = vmul.f32 %v2542, %v610
      %v2575 = vmul.f32 %v2543, %v611
      %v2576 = vmul.f32 %v2544, %v612
      %v2577 = vmul.f32 %v2545, %v613
      %v2578 = vmul.f32 %v2546, %v614
      %v2579 = vmul.f32 %v2547, %v615
      %v2580 = vmul.f32 %v2548, %v616
      %v2581 = vmul.f32 %v2549, %v617
      %v2582 = vmul.f32 %v2550, %v618
      %v2583 = vmul.f32 %v2551, %v619
      %v2584 = vmul.f32 %v2552, %v620
      %v2585 = vmul.f32 %v2553, %v621
      %v2586 = vmul.f32 %v2554, %v622
      %v2587 = vmul.f32 %v2555, %v623
      %v2588 = vmul.f32 %v2556, %v624
      %v2589 = vmul.f32 %v2557, %v625
      %v2590 = vmul.f32 %v2558, %v626
      %v2591 = vmul.f32 %v2559, %v627
      %v2592 = vmul.f32 %v2560, %v628
      %v2593 = vmul.f32 %v2561, %v629
      %v2594 = vmul.f32 %v2562, %v630
      %v2595 = vmul.f32 %v2563, %v631
      %v2596 = vmul.f32 %v2564, %v632
      %v2597 = vmul.f32 %v2565, %v633
      %v2598 = vmul.f32 %v2566, %v634
      %v2599 = vmul.f32 %v2567, %v635
      %v2600 = vmul.f32 %v2568, %v636
      %v2601 = vmul.f32 %v2569, %v637
      %v2602 = vmul.f32 %v2570, %v638
      %v2603 = vmul.f32 %v2571, %v639
      %v2604 = vmul.f32 %v2572, %v640
      %v2605 = vsel %vm821, %v2573, 0.0
      %v2606 = vsel %vm822, %v2574, 0.0
      %v2607 = vsel %vm823, %v2575, 0.0
      %v2608 = vsel %vm824, %v2576, 0.0
      %v2609 = vsel %vm825, %v2577, 0.0
      %v2610 = vsel %vm826, %v2578, 0.0
      %v2611 = vsel %vm827, %v2579, 0.0
      %v2612 = vsel %vm828, %v2580, 0.0
      %v2613 = vsel %vm829, %v2581, 0.0
      %v2614 = vsel %vm830, %v2582, 0.0
      %v2615 = vsel %vm831, %v2583, 0.0
      %v2616 = vsel %vm832, %v2584, 0.0
      %v2617 = vsel %vm833, %v2585, 0.0
      %v2618 = vsel %vm834, %v2586, 0.0
      %v2619 = vsel %vm835, %v2587, 0.0
      %v2620 = vsel %vm836, %v2588, 0.0
      %v2621 = vsel %vm837, %v2589, 0.0
      %v2622 = vsel %vm838, %v2590, 0.0
      %v2623 = vsel %vm839, %v2591, 0.0
      %v2624 = vsel %vm840, %v2592, 0.0
      %v2625 = vsel %vm841, %v2593, 0.0
      %v2626 = vsel %vm842, %v2594, 0.0
      %v2627 = vsel %vm843, %v2595, 0.0
      %v2628 = vsel %vm844, %v2596, 0.0
      %v2629 = vsel %vm845, %v2597, 0.0
      %v2630 = vsel %vm846, %v2598, 0.0
      %v2631 = vsel %vm847, %v2599, 0.0
      %v2632 = vsel %vm848, %v2600, 0.0
      %v2633 = vsel %vm849, %v2601, 0.0
      %v2634 = vsel %vm850, %v2602, 0.0
      %v2635 = vsel %vm851, %v2603, 0.0
      %v2636 = vsel %vm852, %v2604, 0.0
      %v2637 = vld [vmem:[%s554] sm:$0xff]
      %v2638 = vld [vmem:[%s554 + $0x8] sm:$0xff]
      %v2639 = vld [vmem:[%s554 + $0x10] sm:$0xff]
      %v2640 = vld [vmem:[%s554 + $0x18] sm:$0xff]
      %v2641 = vld [vmem:[%s554 + $0x20] sm:$0xff]
      %v2642 = vld [vmem:[%s554 + $0x28] sm:$0xff]
      %v2643 = vld [vmem:[%s554 + $0x30] sm:$0xff]
      %v2644 = vld [vmem:[%s554 + $0x38] sm:$0xff]
      %v2645 = vld [vmem:[%s554 + $0x40] sm:$0xff]
      %v2646 = vld [vmem:[%s554 + $0x48] sm:$0xff]
      %v2647 = vld [vmem:[%s554 + $0x50] sm:$0xff]
      %v2648 = vld [vmem:[%s554 + $0x58] sm:$0xff]
      %v2649 = vld [vmem:[%s554 + $0x60] sm:$0xff]
      %v2650 = vld [vmem:[%s554 + $0x68] sm:$0xff]
      %v2651 = vld [vmem:[%s554 + $0x70] sm:$0xff]
      %v2652 = vld [vmem:[%s554 + $0x78] sm:$0xff]
      %v2653 = vadd.f32 %v2605, %v2606
      %2654 = vadd.xlane.f32.xlu0 %v2653
      %v2655 = vpop.xlane.xlu0 %2654
      %v2656 = vadd.f32 %v2607, %v2608
      %2657 = vadd.xlane.f32.xlu0 %v2656
      %v2658 = vpop.xlane.xlu0 %2657
      %v2659 = vadd.f32 %v2609, %v2610
      %2660 = vadd.xlane.f32.xlu0 %v2659
      %v2661 = vpop.xlane.xlu0 %2660
      %v2662 = vadd.f32 %v2611, %v2612
      %2663 = vadd.xlane.f32.xlu0 %v2662
      %v2664 = vpop.xlane.xlu0 %2663
      %v2665 = vadd.f32 %v2613, %v2614
      %2666 = vadd.xlane.f32.xlu0 %v2665
      %v2667 = vpop.xlane.xlu0 %2666
      %v2668 = vadd.f32 %v2615, %v2616
      %2669 = vadd.xlane.f32.xlu0 %v2668
      %v2670 = vpop.xlane.xlu0 %2669
      %v2671 = vadd.f32 %v2617, %v2618
      %2672 = vadd.xlane.f32.xlu0 %v2671
      %v2673 = vpop.xlane.xlu0 %2672
      %v2674 = vadd.f32 %v2619, %v2620
      %2675 = vadd.xlane.f32.xlu0 %v2674
      %v2676 = vpop.xlane.xlu0 %2675
      %v2677 = vadd.f32 %v2621, %v2622
      %2678 = vadd.xlane.f32.xlu0 %v2677
      %v2679 = vpop.xlane.xlu0 %2678
      %v2680 = vadd.f32 %v2623, %v2624
      %2681 = vadd.xlane.f32.xlu0 %v2680
      %v2682 = vpop.xlane.xlu0 %2681
      %v2683 = vadd.f32 %v2625, %v2626
      %2684 = vadd.xlane.f32.xlu0 %v2683
      %v2685 = vpop.xlane.xlu0 %2684
      %v2686 = vadd.f32 %v2627, %v2628
      %2687 = vadd.xlane.f32.xlu0 %v2686
      %v2688 = vpop.xlane.xlu0 %2687
      %v2689 = vadd.f32 %v2629, %v2630
      %2690 = vadd.xlane.f32.xlu0 %v2689
      %v2691 = vpop.xlane.xlu0 %2690
      %v2692 = vadd.f32 %v2631, %v2632
      %2693 = vadd.xlane.f32.xlu0 %v2692
      %v2694 = vpop.xlane.xlu0 %2693
      %v2695 = vadd.f32 %v2633, %v2634
      %2696 = vadd.xlane.f32.xlu0 %v2695
      %v2697 = vpop.xlane.xlu0 %2696
      %v2698 = vadd.f32 %v2635, %v2636
      %2699 = vadd.xlane.f32.xlu0 %v2698
      %v2700 = vpop.xlane.xlu0 %2699
      %v2701 = vmul.f32 %v2655, 0.5
      %v2702 = vmul.f32 %v2658, 0.5
      %v2703 = vmul.f32 %v2661, 0.5
      %v2704 = vmul.f32 %v2664, 0.5
      %v2705 = vmul.f32 %v2667, 0.5
      %v2706 = vmul.f32 %v2670, 0.5
      %v2707 = vmul.f32 %v2673, 0.5
      %v2708 = vmul.f32 %v2676, 0.5
      %v2709 = vmul.f32 %v2679, 0.5
      %v2710 = vmul.f32 %v2682, 0.5
      %v2711 = vmul.f32 %v2685, 0.5
      %v2712 = vmul.f32 %v2688, 0.5
      %v2713 = vmul.f32 %v2691, 0.5
      %v2714 = vmul.f32 %v2694, 0.5
      %v2715 = vmul.f32 %v2697, 0.5
      %v2716 = vmul.f32 %v2700, 0.5
      %v2717 = vadd.f32 %v2637, %v2701
      %v2718 = vadd.f32 %v2638, %v2702
      %v2719 = vadd.f32 %v2639, %v2703
      %v2720 = vadd.f32 %v2640, %v2704
      %v2721 = vadd.f32 %v2641, %v2705
      %v2722 = vadd.f32 %v2642, %v2706
      %v2723 = vadd.f32 %v2643, %v2707
      %v2724 = vadd.f32 %v2644, %v2708
      %v2725 = vadd.f32 %v2645, %v2709
      %v2726 = vadd.f32 %v2646, %v2710
      %v2727 = vadd.f32 %v2647, %v2711
      %v2728 = vadd.f32 %v2648, %v2712
      %v2729 = vadd.f32 %v2649, %v2713
      %v2730 = vadd.f32 %v2650, %v2714
      %v2731 = vadd.f32 %v2651, %v2715
      %v2732 = vadd.f32 %v2652, %v2716
      %vm2733 = vcmask 7168
      %2734 = vst.msk [vmem:[%s554] sm:$0xff] %vm2733, %v2717
      %2735 = vst.msk [vmem:[%s554 + $0x8] sm:$0xff] %vm2733, %v2718
      %2736 = vst.msk [vmem:[%s554 + $0x10] sm:$0xff] %vm2733, %v2719
      %2737 = vst.msk [vmem:[%s554 + $0x18] sm:$0xff] %vm2733, %v2720
      %2738 = vst.msk [vmem:[%s554 + $0x20] sm:$0xff] %vm2733, %v2721
      %2739 = vst.msk [vmem:[%s554 + $0x28] sm:$0xff] %vm2733, %v2722
      %2740 = vst.msk [vmem:[%s554 + $0x30] sm:$0xff] %vm2733, %v2723
      %2741 = vst.msk [vmem:[%s554 + $0x38] sm:$0xff] %vm2733, %v2724
      %2742 = vst.msk [vmem:[%s554 + $0x40] sm:$0xff] %vm2733, %v2725
      %2743 = vst.msk [vmem:[%s554 + $0x48] sm:$0xff] %vm2733, %v2726
      %2744 = vst.msk [vmem:[%s554 + $0x50] sm:$0xff] %vm2733, %v2727
      %2745 = vst.msk [vmem:[%s554 + $0x58] sm:$0xff] %vm2733, %v2728
      %2746 = vst.msk [vmem:[%s554 + $0x60] sm:$0xff] %vm2733, %v2729
      %2747 = vst.msk [vmem:[%s554 + $0x68] sm:$0xff] %vm2733, %v2730
      %2748 = vst.msk [vmem:[%s554 + $0x70] sm:$0xff] %vm2733, %v2731
      %2749 = vst.msk [vmem:[%s554 + $0x78] sm:$0xff] %vm2733, %v2732
      %s2750 = smul.u32 16, %s24
      %p2751 = scmp.lt.s32.totalorder %s2750, 31
      %s2752 = scalar_select %p2751, %s2750, 31
      %s2753 = smul.addr %s2752, 8
      %s2754 = scalar_lea.vmem %s9, %s2753
      // Predicated region
      $region61: #{tpu_custom_call.1} parent=55 // pred_check
        %p2755 = pneg %p288
      $region62: #{tpu_custom_call.1} parent=55 // pred_check_branch
        %2757 = sbr.rel (%p2755) target = $region64
      $region63: #{tpu_custom_call.1} parent=55 // pred_region
        %s2758 = smul.u32 16, %s24
      $region64: #{tpu_custom_call.1} parent=55 // pred_fallthru
        _
    $region56: #{tpu_custom_call.1} parent=5 // pred_fallthru
      _
    %p2759 = scmp.le.s32.totalorder 2, %s15
    // Predicated region
    $region65: #{tpu_custom_call.1} parent=5 // pred_check
      %p2760 = pneg %p2759
    $region66: #{tpu_custom_call.1} parent=5 // pred_check_branch
      %2762 = sbr.rel (%p2760) target = $region68
    $region67: #{tpu_custom_call.1} parent=5 // pred_region
      %s2763 = ssub.s32 %s15, 2
      // Predicated region
      $region69: #{tpu_custom_call.1} parent=67 // pred_check
        %p2764 = pneg %p294
      $region70: #{tpu_custom_call.1} parent=67 // pred_check_branch
        %2766 = sbr.rel (%p2764) target = $region72
      $region71: #{tpu_custom_call.1} parent=67 // pred_region
        %s2767 = smul.u32 16, %s26
        %p2768 = scmp.lt.s32.totalorder %s2767, 31
        %s2769 = scalar_select %p2768, %s2767, 31
        %s2770 = smul.addr %s2769, 8
        %s2771 = scalar_lea.vmem %s9, %s2770
      $region72: #{tpu_custom_call.1} parent=67 // pred_fallthru
        _
    $region68: #{tpu_custom_call.1} parent=5 // pred_fallthru
      _
  $region6: #{tpu_custom_call.1} parent=0 // loop_footer
    %s19 = sadd.s32 1, %s15
  $region7: #{tpu_custom_call.1} parent=0 // loop_footer_branch
    %14 = sbr.rel target = $region3
  $region8: #{tpu_custom_call.1} parent=0 // loop_exit
    _

</llo_original>
